<compile_context>
chip_gen: v6e
topology: v6e:2x2x1
jax: 0.10.0
libtpu: 0.0.40
codegen_flags: <defaults>
</compile_context>

<pallas_src>
import functools

import jax
import jax.numpy as jnp
import numpy as np
from jax import lax
from jax.experimental import pallas as pl
from jax.experimental.pallas import tpu as pltpu


_DEFAULT_VMEM_CAP = 64 * 1024 * 1024  # conservative (v7x-sized) fallback


def _round_up(x, m):
    return (x + m - 1) // m * m


def _vmem_budgets():
    """Generation-aware VMEM budgets (v5e/v6e: 128 MiB physical, v7x: 64 MiB)."""
    try:
        cap = int(pltpu.get_tpu_info().vmem_capacity_bytes)
    except Exception:
        cap = _DEFAULT_VMEM_CAP
    row_budget = cap // 8                                   # ~16 MiB v5e/v6e, ~8 MiB v7x
    vmem_limit = min(cap * 3 // 4, 100 * 1024 * 1024)       # ~96 MiB v5e/v6e, 48 MiB v7x
    return row_budget, vmem_limit


def _vmem_estimate(th, W, C, Cout, in_bytes):
    """Rough per-step working set (double-buffered blocks + f32 temps)."""
    rows_w = (th + 2) * W
    est = 2 * th * W * C * in_bytes            # double-buffered core input block
    est += 2 * 2 * W * C * in_bytes            # double-buffered halo rows
    est += 2 * th * W * Cout * in_bytes        # double-buffered output block
    est += (rows_w + 2) * C * 4                # xpe (f32)
    est += 3 * rows_w * C * 4                  # three column-shifted taps (f32)
    est += th * W * C * 4                      # depthwise accumulator
    est += 2 * th * W * Cout * 4               # 1x1 result + store temp
    return est


def _pick_row_tile(H, W, C, Cout, in_bytes, batch, budget):
    """Largest divisor of H whose working set fits the budget.  Prefer an even
    total tile count (batch * H/t) so both v7x TensorCores stay busy."""
    fits = [t for t in range(1, H + 1)
            if H % t == 0 and _vmem_estimate(t, W, C, Cout, in_bytes) <= budget]
    if not fits:
        return 1
    best = max(fits)
    even = [t for t in fits if (batch * (H // t)) % 2 == 0]
    if even and 2 * max(even) >= best:
        best = max(even)
    return best


def _dwconv_block_kernel(*refs, th, W, apply_act, has_halo):
    """One (batch, row-tile) block per grid step.

    With halo (n_row_tiles > 1):
        x_ref (1, th, W, Cin), xtop_ref (1, 1, W, Cin), xbot_ref (1, 1, W, Cin),
        dw_ref (3, 3, Cin), pw_ref (Cin, Cout)   [BN scale pre-folded],
        shift_ref (1, Cout), out_ref (1, th, W, Cout)
    Without halo (th == H): same, minus xtop_ref / xbot_ref.
    """
    if has_halo:
        x_ref, xtop_ref, xbot_ref, dw_ref, pw_ref, shift_ref, out_ref = refs
    else:
        x_ref, dw_ref, pw_ref, shift_ref, out_ref = refs

    cin = x_ref.shape[-1]
    cout = out_ref.shape[-1]
    rows_w = (th + 2) * W
    f32 = jnp.float32

    # Hoisted f32 cast of the tile (one cast, not one per tap).
    core = x_ref[0].astype(f32).reshape(th * W, cin)          # (th*W, Cin)
    zrow = jnp.zeros((1, cin), f32)
    if has_halo:
        i = pl.program_id(1)
        last = pl.num_programs(1) - 1
        # Halo rows were fetched with a clamped row index; zero them at the
        # image top / bottom to realize the "same"-padding zero border.
        top = jnp.where(i > 0, xtop_ref[0, 0].astype(f32), 0.0)       # (W, Cin)
        bot = jnp.where(i < last, xbot_ref[0, 0].astype(f32), 0.0)    # (W, Cin)
        # Single concatenate builds both the halo-extended tile and the +/-1
        # element-row guard used by the column taps below.
        xpe = jnp.concatenate([zrow, top, core, bot, zrow], axis=0)   # (rows_w+2, Cin)
    else:
        zpad = jnp.zeros((W + 1, cin), f32)
        xpe = jnp.concatenate([zpad, core, zpad], axis=0)             # (rows_w+2, Cin)
    # xpe[r + 1] == (halo-extended tile flattened rows-of-W)[r]

    # Column-position wrap mask, shape (rows_w, 1): varies only along sublanes
    # and broadcasts along lanes (no 3-D int32 temp).
    wpos = lax.broadcasted_iota(jnp.int32, (rows_w, 1), 0) % W
    s_m1 = jnp.where(wpos >= 1, xpe[0:rows_w], 0.0)             # x[h, w-1]
    s_c = xpe[1:rows_w + 1]                                     # x[h, w  ]
    s_p1 = jnp.where(wpos <= W - 2, xpe[2:rows_w + 2], 0.0)     # x[h, w+1]

    # Depthwise 3x3: 9 multiply-adds, W-aligned row-tap slices, f32 accumulate.
    dw = dw_ref[...].astype(f32)                                # (3, 3, Cin)
    taps = (s_m1, s_c, s_p1)                                    # kw = 0, 1, 2
    acc = jnp.zeros((th * W, cin), f32)
    for kw in range(3):
        t = taps[kw]
        for kh in range(3):
            acc = acc + t[kh * W:(kh + th) * W] * dw[kh, kw]

    # Pointwise 1x1 conv on the MXU (BN scale already folded into pw), fused
    # bias/BN shift, optional Swish.
    y = jnp.dot(acc.astype(pw_ref.dtype), pw_ref[...],
                preferred_element_type=jnp.float32)             # (th*W, Cout)
    y = y + shift_ref[0]
    if apply_act:
        y = y * jax.nn.sigmoid(y)                               # Swish
    out_ref[...] = y.reshape(1, th, W, cout).astype(out_ref.dtype)


def depthwise_conv_block(x_nchw, dw_w, pw_w, pw_b,
                         bn_gamma=None, bn_beta=None, bn_mean=None, bn_var=None,
                         *, eps=1e-3, apply_norm=True, apply_activation=False,
                         row_tile=None, mxu_bf16=True):
    """NCHW in / NCHW out, matching PyTorch DepthWiseConvBlock.forward (eval BN)."""
    N, C, H, W = x_nchw.shape
    Cout = pw_w.shape[0]
    dt = x_nchw.dtype
    in_bytes = jnp.dtype(dt).itemsize

    # One NCHW -> NHWC relayout at the module boundary (channels on lanes).
    # TODO(synk): in a full network keep activations NHWC end-to-end so these
    #             boundary transposes (full HBM passes) disappear.
    x = jnp.transpose(x_nchw, (0, 2, 3, 1))

    # Pad W to a multiple of 8 so row-tap slices and (th,W,C)<->(th*W,C)
    # reshapes stay sublane-aligned; the zero columns reproduce the right-edge
    # "same" padding exactly and the extra output columns are sliced off.
    Wp = max(_round_up(W, 8), 8)
    if Wp != W:
        x = jnp.pad(x, ((0, 0), (0, 0), (0, Wp - W), (0, 0)))

    row_budget, vmem_limit = _vmem_budgets()
    if row_tile is None:
        row_tile = _pick_row_tile(H, Wp, C, Cout, in_bytes, N, row_budget)
    if H % row_tile != 0:
        # TODO(synk): support a ragged last row tile instead of requiring a divisor.
        raise ValueError("row_tile must divide H")
    th = row_tile
    n_row_tiles = H // th
    has_halo = n_row_tiles > 1

    # Weight prep (one-time transforms):
    #   depthwise (Cin,1,3,3) -> (3,3,Cin) f32
    #   pointwise (Cout,Cin,1,1) -> (Cin,Cout) with BN scale folded in.
    dw = jnp.transpose(dw_w[:, 0, :, :], (1, 2, 0)).astype(jnp.float32)
    pw = jnp.transpose(pw_w[:, :, 0, 0], (1, 0)).astype(jnp.float32)
    if apply_norm:
        s = (bn_gamma / jnp.sqrt(bn_var + eps)).astype(jnp.float32)
        shift = (pw_b - bn_mean) * s + bn_beta
        pw = pw * s[None, :]
    else:
        shift = pw_b
    # TODO(synk): training-mode (batch-statistics) BatchNorm is not implemented.
    pw = pw.astype(jnp.bfloat16 if mxu_bf16 else jnp.float32)
    shift = shift.astype(jnp.float32).reshape(1, Cout)
    # TODO(synk): for large layers, pad Cin to a lane multiple network-wide so the
    #             VPU taps and the MXU K dim run lane-dense; skipped for a
    #             standalone module since it would inflate input DMA.

    kernel = functools.partial(_dwconv_block_kernel, th=th, W=Wp,
                               apply_act=apply_activation, has_halo=has_halo)

    # Core rows (auto double-buffered; add pipeline_mode=pl.Buffered(3) here if
    # xprof ever shows exposed DMA at small tiles).
    in_specs = [pl.BlockSpec((1, th, Wp, C), lambda n, i: (n, i, 0, 0))]
    args = [x]
    if has_halo:
        # One halo row above / below, fetched with a clamped row index; the
        # kernel zeroes them at the image border.  Dropped entirely when the
        # whole image fits one row tile.
        in_specs += [
            pl.BlockSpec((1, 1, Wp, C),
                         lambda n, i: (n, jnp.maximum(i * th - 1, 0), 0, 0)),
            pl.BlockSpec((1, 1, Wp, C),
                         lambda n, i: (n, jnp.minimum((i + 1) * th, H - 1), 0, 0)),
        ]
        args += [x, x]
    in_specs += [
        pl.BlockSpec((3, 3, C), lambda n, i: (0, 0, 0)),
        pl.BlockSpec((C, Cout), lambda n, i: (0, 0)),
        pl.BlockSpec((1, Cout), lambda n, i: (0, 0)),
    ]
    args += [dw, pw, shift]

    out_nhwc = pl.pallas_call(
        kernel,
        # True-size output: no Cout->128 padding, no write inflation, no
        # slice-off pass afterwards.
        out_shape=jax.ShapeDtypeStruct((N, H, Wp, Cout), dt),
        grid_spec=pl.GridSpec(
            grid=(N, n_row_tiles),
            in_specs=in_specs,
            out_specs=pl.BlockSpec((1, th, Wp, Cout), lambda n, i: (n, i, 0, 0)),
        ),
        compiler_params=pltpu.CompilerParams(
            dimension_semantics=("parallel", "parallel"),
            vmem_limit_bytes=int(vmem_limit)),
    )(*args)

    out = out_nhwc if Wp == W else out_nhwc[:, :, :W, :]
    return jnp.transpose(out, (0, 3, 1, 2))


def _reference(x, dw_w, pw_w, pw_b, gamma, beta, mean, var,
               eps, apply_norm, apply_act):
    """Pure-JAX reference matching the PyTorch forward (eval-mode BN)."""
    y = lax.conv_general_dilated(
        x, dw_w, window_strides=(1, 1), padding=[(1, 1), (1, 1)],
        dimension_numbers=('NCHW', 'OIHW', 'NCHW'),
        feature_group_count=x.shape[1])
    y = lax.conv_general_dilated(
        y, pw_w, window_strides=(1, 1), padding='VALID',
        dimension_numbers=('NCHW', 'OIHW', 'NCHW'))
    y = y + pw_b[None, :, None, None]
    if apply_norm:
        y = ((y - mean[None, :, None, None])
             / jnp.sqrt(var[None, :, None, None] + eps)
             * gamma[None, :, None, None] + beta[None, :, None, None])
    if apply_act:
        y = y * jax.nn.sigmoid(y)
    return y


if __name__ == "__main__":
    key = jax.random.PRNGKey(0)
    k_x, k_dw, k_pw, k_pb, k_g, k_b, k_m, k_v = jax.random.split(key, 8)

    N, Cin, H, W = 2, 4, 16, 16
    Cout = 8
    eps = 1e-3

    x = jax.random.normal(k_x, (N, Cin, H, W), jnp.float32)
    # Depthwise conv weight: (in_channels, 1, 3, 3), bias=False.
    dw_w = jax.random.normal(k_dw, (Cin, 1, 3, 3), jnp.float32) * 0.2
    # Pointwise conv weight/bias: (out_channels, in_channels, 1, 1), (out_channels,).
    pw_w = jax.random.normal(k_pw, (Cout, Cin, 1, 1), jnp.float32) * 0.2
    pw_b = jax.random.normal(k_pb, (Cout,), jnp.float32) * 0.1
    # BatchNorm parameters / running stats.
    bn_gamma = 0.5 + jax.random.uniform(k_g, (Cout,), jnp.float32)
    bn_beta = jax.random.normal(k_b, (Cout,), jnp.float32) * 0.1
    bn_mean = jax.random.normal(k_m, (Cout,), jnp.float32) * 0.1
    bn_var = 0.5 + jax.random.uniform(k_v, (Cout,), jnp.float32)

    # Config A: forced two row tiles (exercises the halo / border path), f32 MXU
    # feed.  Tolerance allows for the TPU's default (bf16-pass) f32 matmul
    # precision; structural errors would be O(0.1).
    out_a = depthwise_conv_block(
        x, dw_w, pw_w, pw_b, bn_gamma, bn_beta, bn_mean, bn_var,
        eps=eps, apply_norm=True, apply_activation=False,
        row_tile=8, mxu_bf16=False)
    out_a = jax.block_until_ready(out_a)
    ref_a = _reference(x, dw_w, pw_w, pw_b, bn_gamma, bn_beta, bn_mean, bn_var,
                       eps, True, False)
    np.testing.assert_allclose(np.asarray(out_a), np.asarray(ref_a),
                               rtol=1e-2, atol=1e-2)

    # Config B: auto row tile (whole image -> single-stream, no-halo path),
    # bf16-fed MXU (f32 accumulate), BN + Swish.
    out_b = depthwise_conv_block(
        x, dw_w, pw_w, pw_b, bn_gamma, bn_beta, bn_mean, bn_var,
        eps=eps, apply_norm=True, apply_activation=True,
        row_tile=None, mxu_bf16=True)
    out_b = jax.block_until_ready(out_b)
    ref_b = _reference(x, dw_w, pw_w, pw_b, bn_gamma, bn_beta, bn_mean, bn_var,
                       eps, True, True)
    np.testing.assert_allclose(np.asarray(out_b), np.asarray(ref_b),
                               rtol=2.5e-2, atol=2.5e-2)

    print("KERNEL_OK")
</pallas_src>

<mosaic_0001>
module attributes {stable_mosaic.version = 11 : i64} {
  func.func @_dwconv_block_kernel(%arg0: i32, %arg1: i32, %arg2: memref<1x8x16x4xf32, #tpu.memory_space<vmem>>, %arg3: memref<1x1x16x4xf32, #tpu.memory_space<vmem>>, %arg4: memref<1x1x16x4xf32, #tpu.memory_space<vmem>>, %arg5: memref<3x3x4xf32, #tpu.memory_space<vmem>>, %arg6: memref<4x8xf32, #tpu.memory_space<vmem>>, %arg7: memref<1x8xf32, #tpu.memory_space<vmem>>, %arg8: memref<1x8x16x8xf32, #tpu.memory_space<vmem>>) attributes {dimension_semantics = [#tpu.dimension_semantics<parallel>, #tpu.dimension_semantics<parallel>], iteration_bounds = array<i64: 2, 2>, scalar_prefetch = 0 : i64, scratch_operands = 0 : i64, tpu.core_type = #tpu.core_type<tc>, window_params = [{transform_indices = @transform_0, window_bounds = array<i64: 1, 8, 16, 4>}, {transform_indices = @transform_1, window_bounds = array<i64: 1, 1, 16, 4>}, {transform_indices = @transform_2, window_bounds = array<i64: 1, 1, 16, 4>}, {pipeline_mode = #tpu.pipeline_mode<synchronous>, transform_indices = @transform_3, window_bounds = array<i64: 3, 3, 4>}, {pipeline_mode = #tpu.pipeline_mode<synchronous>, transform_indices = @transform_4, window_bounds = array<i64: 4, 8>}, {pipeline_mode = #tpu.pipeline_mode<synchronous>, transform_indices = @transform_5, window_bounds = array<i64: 1, 8>}, {transform_indices = @transform_6, window_bounds = array<i64: 1, 8, 16, 8>}]} {
    %c0 = arith.constant 0 : index
    %c0_0 = arith.constant 0 : index
    %c0_1 = arith.constant 0 : index
    %c0_2 = arith.constant 0 : index
    %0 = vector.load %arg2[%c0, %c0_0, %c0_1, %c0_2] : memref<1x8x16x4xf32, #tpu.memory_space<vmem>>, vector<1x8x16x4xf32>
    %1 = vector.shape_cast %0 : vector<1x8x16x4xf32> to vector<8x16x4xf32>
    %2 = vector.shape_cast %1 : vector<8x16x4xf32> to vector<128x4xf32>
    %cst = arith.constant 0.000000e+00 : f32
    %3 = vector.broadcast %cst : f32 to vector<1x4xf32>
    %c0_i32 = arith.constant 0 : i32
    %4 = arith.cmpi sgt, %arg1, %c0_i32 : i32
    %c0_3 = arith.constant 0 : index
    %c0_4 = arith.constant 0 : index
    %c0_5 = arith.constant 0 : index
    %c0_6 = arith.constant 0 : index
    %5 = vector.load %arg3[%c0_3, %c0_4, %c0_5, %c0_6] : memref<1x1x16x4xf32, #tpu.memory_space<vmem>>, vector<1x1x16x4xf32>
    %6 = vector.shape_cast %5 : vector<1x1x16x4xf32> to vector<16x4xf32>
    %cst_7 = arith.constant 0.000000e+00 : f32
    %7 = vector.broadcast %cst_7 : f32 to vector<16x4xf32>
    %8 = arith.select %4, %6, %7 : vector<16x4xf32>
    %c1_i32 = arith.constant 1 : i32
    %9 = arith.cmpi slt, %arg1, %c1_i32 : i32
    %c0_8 = arith.constant 0 : index
    %c0_9 = arith.constant 0 : index
    %c0_10 = arith.constant 0 : index
    %c0_11 = arith.constant 0 : index
    %10 = vector.load %arg4[%c0_8, %c0_9, %c0_10, %c0_11] : memref<1x1x16x4xf32, #tpu.memory_space<vmem>>, vector<1x1x16x4xf32>
    %11 = vector.shape_cast %10 : vector<1x1x16x4xf32> to vector<16x4xf32>
    %cst_12 = arith.constant 0.000000e+00 : f32
    %12 = vector.broadcast %cst_12 : f32 to vector<16x4xf32>
    %13 = arith.select %9, %11, %12 : vector<16x4xf32>
    %14 = tpu.concatenate %3, %8, %2, %13, %3 in 0 : vector<1x4xf32>, vector<16x4xf32>, vector<128x4xf32>, vector<16x4xf32>, vector<1x4xf32> -> vector<162x4xf32>
    %15 = tpu.iota {dimensions = array<i32: 0>} : vector<160x1xi32>
    %c16_i32 = arith.constant 16 : i32
    %c0_i32_13 = arith.constant 0 : i32
    %16 = arith.cmpi eq, %c16_i32, %c0_i32_13 : i32
    %c1_i32_14 = arith.constant 1 : i32
    %17 = arith.select %16, %c1_i32_14, %c16_i32 : i32
    %18 = vector.broadcast %17 : i32 to vector<160x1xi32>
    %19 = arith.remsi %15, %18 : vector<160x1xi32>
    %c0_i32_15 = arith.constant 0 : i32
    %20 = vector.broadcast %c0_i32_15 : i32 to vector<160x1xi32>
    %21 = arith.cmpi ne, %19, %20 : vector<160x1xi32>
    %c0_i32_16 = arith.constant 0 : i32
    %22 = vector.broadcast %c0_i32_16 : i32 to vector<160x1xi32>
    %23 = arith.cmpi slt, %19, %22 : vector<160x1xi32>
    %c0_i32_17 = arith.constant 0 : i32
    %24 = arith.cmpi slt, %17, %c0_i32_17 : i32
    %25 = vector.broadcast %24 : i1 to vector<160x1xi1>
    %26 = vector.broadcast %25 : vector<160x1xi1> to vector<160x1xi1>
    %27 = arith.xori %23, %26 : vector<160x1xi1>
    %28 = arith.andi %27, %21 : vector<160x1xi1>
    %29 = vector.broadcast %17 : i32 to vector<160x1xi32>
    %30 = arith.addi %19, %29 : vector<160x1xi32>
    %31 = arith.select %28, %30, %19 : vector<160x1xi1>, vector<160x1xi32>
    %c1_i32_18 = arith.constant 1 : i32
    %32 = vector.broadcast %c1_i32_18 : i32 to vector<160x1xi32>
    %33 = arith.cmpi sge, %31, %32 : vector<160x1xi32>
    %34 = vector.extract_strided_slice %14 {offsets = [0, 0], sizes = [160, 4], strides = [1, 1]} : vector<162x4xf32> to vector<160x4xf32>
    %cst_19 = arith.constant 0.000000e+00 : f32
    %35 = vector.shape_cast %33 : vector<160x1xi1> to vector<160x1xi1>
    %36 = vector.broadcast %35 : vector<160x1xi1> to vector<160x4xi1>
    %37 = vector.broadcast %cst_19 : f32 to vector<160x4xf32>
    %38 = arith.select %36, %34, %37 : vector<160x4xi1>, vector<160x4xf32>
    %39 = vector.extract_strided_slice %14 {offsets = [1, 0], sizes = [160, 4], strides = [1, 1]} : vector<162x4xf32> to vector<160x4xf32>
    %c14_i32 = arith.constant 14 : i32
    %40 = vector.broadcast %c14_i32 : i32 to vector<160x1xi32>
    %41 = arith.cmpi sle, %31, %40 : vector<160x1xi32>
    %42 = vector.extract_strided_slice %14 {offsets = [2, 0], sizes = [160, 4], strides = [1, 1]} : vector<162x4xf32> to vector<160x4xf32>
    %cst_20 = arith.constant 0.000000e+00 : f32
    %43 = vector.shape_cast %41 : vector<160x1xi1> to vector<160x1xi1>
    %44 = vector.broadcast %43 : vector<160x1xi1> to vector<160x4xi1>
    %45 = vector.broadcast %cst_20 : f32 to vector<160x4xf32>
    %46 = arith.select %44, %42, %45 : vector<160x4xi1>, vector<160x4xf32>
    %c0_21 = arith.constant 0 : index
    %c0_22 = arith.constant 0 : index
    %c0_23 = arith.constant 0 : index
    %47 = vector.load %arg5[%c0_21, %c0_22, %c0_23] : memref<3x3x4xf32, #tpu.memory_space<vmem>>, vector<3x3x4xf32>
    %cst_24 = arith.constant 0.000000e+00 : f32
    %48 = vector.broadcast %cst_24 : f32 to vector<128x4xf32>
    %49 = vector.extract_strided_slice %38 {offsets = [0, 0], sizes = [128, 4], strides = [1, 1]} : vector<160x4xf32> to vector<128x4xf32>
    %50 = vector.extract_strided_slice %47 {offsets = [0, 0, 0], sizes = [1, 1, 4], strides = [1, 1, 1]} : vector<3x3x4xf32> to vector<1x1x4xf32>
    %51 = vector.shape_cast %50 : vector<1x1x4xf32> to vector<4xf32>
    %52 = vector.shape_cast %51 : vector<4xf32> to vector<1x4xf32>
    %53 = vector.broadcast %52 : vector<1x4xf32> to vector<128x4xf32>
    %54 = arith.mulf %49, %53 : vector<128x4xf32>
    %55 = arith.addf %48, %54 : vector<128x4xf32>
    %56 = vector.extract_strided_slice %38 {offsets = [16, 0], sizes = [128, 4], strides = [1, 1]} : vector<160x4xf32> to vector<128x4xf32>
    %57 = vector.extract_strided_slice %47 {offsets = [1, 0, 0], sizes = [1, 1, 4], strides = [1, 1, 1]} : vector<3x3x4xf32> to vector<1x1x4xf32>
    %58 = vector.shape_cast %57 : vector<1x1x4xf32> to vector<4xf32>
    %59 = vector.shape_cast %58 : vector<4xf32> to vector<1x4xf32>
    %60 = vector.broadcast %59 : vector<1x4xf32> to vector<128x4xf32>
    %61 = arith.mulf %56, %60 : vector<128x4xf32>
    %62 = arith.addf %55, %61 : vector<128x4xf32>
    %63 = vector.extract_strided_slice %38 {offsets = [32, 0], sizes = [128, 4], strides = [1, 1]} : vector<160x4xf32> to vector<128x4xf32>
    %64 = vector.extract_strided_slice %47 {offsets = [2, 0, 0], sizes = [1, 1, 4], strides = [1, 1, 1]} : vector<3x3x4xf32> to vector<1x1x4xf32>
    %65 = vector.shape_cast %64 : vector<1x1x4xf32> to vector<4xf32>
    %66 = vector.shape_cast %65 : vector<4xf32> to vector<1x4xf32>
    %67 = vector.broadcast %66 : vector<1x4xf32> to vector<128x4xf32>
    %68 = arith.mulf %63, %67 : vector<128x4xf32>
    %69 = arith.addf %62, %68 : vector<128x4xf32>
    %70 = vector.extract_strided_slice %39 {offsets = [0, 0], sizes = [128, 4], strides = [1, 1]} : vector<160x4xf32> to vector<128x4xf32>
    %71 = vector.extract_strided_slice %47 {offsets = [0, 1, 0], sizes = [1, 1, 4], strides = [1, 1, 1]} : vector<3x3x4xf32> to vector<1x1x4xf32>
    %72 = vector.shape_cast %71 : vector<1x1x4xf32> to vector<4xf32>
    %73 = vector.shape_cast %72 : vector<4xf32> to vector<1x4xf32>
    %74 = vector.broadcast %73 : vector<1x4xf32> to vector<128x4xf32>
    %75 = arith.mulf %70, %74 : vector<128x4xf32>
    %76 = arith.addf %69, %75 : vector<128x4xf32>
    %77 = vector.extract_strided_slice %39 {offsets = [16, 0], sizes = [128, 4], strides = [1, 1]} : vector<160x4xf32> to vector<128x4xf32>
    %78 = vector.extract_strided_slice %47 {offsets = [1, 1, 0], sizes = [1, 1, 4], strides = [1, 1, 1]} : vector<3x3x4xf32> to vector<1x1x4xf32>
    %79 = vector.shape_cast %78 : vector<1x1x4xf32> to vector<4xf32>
    %80 = vector.shape_cast %79 : vector<4xf32> to vector<1x4xf32>
    %81 = vector.broadcast %80 : vector<1x4xf32> to vector<128x4xf32>
    %82 = arith.mulf %77, %81 : vector<128x4xf32>
    %83 = arith.addf %76, %82 : vector<128x4xf32>
    %84 = vector.extract_strided_slice %39 {offsets = [32, 0], sizes = [128, 4], strides = [1, 1]} : vector<160x4xf32> to vector<128x4xf32>
    %85 = vector.extract_strided_slice %47 {offsets = [2, 1, 0], sizes = [1, 1, 4], strides = [1, 1, 1]} : vector<3x3x4xf32> to vector<1x1x4xf32>
    %86 = vector.shape_cast %85 : vector<1x1x4xf32> to vector<4xf32>
    %87 = vector.shape_cast %86 : vector<4xf32> to vector<1x4xf32>
    %88 = vector.broadcast %87 : vector<1x4xf32> to vector<128x4xf32>
    %89 = arith.mulf %84, %88 : vector<128x4xf32>
    %90 = arith.addf %83, %89 : vector<128x4xf32>
    %91 = vector.extract_strided_slice %46 {offsets = [0, 0], sizes = [128, 4], strides = [1, 1]} : vector<160x4xf32> to vector<128x4xf32>
    %92 = vector.extract_strided_slice %47 {offsets = [0, 2, 0], sizes = [1, 1, 4], strides = [1, 1, 1]} : vector<3x3x4xf32> to vector<1x1x4xf32>
    %93 = vector.shape_cast %92 : vector<1x1x4xf32> to vector<4xf32>
    %94 = vector.shape_cast %93 : vector<4xf32> to vector<1x4xf32>
    %95 = vector.broadcast %94 : vector<1x4xf32> to vector<128x4xf32>
    %96 = arith.mulf %91, %95 : vector<128x4xf32>
    %97 = arith.addf %90, %96 : vector<128x4xf32>
    %98 = vector.extract_strided_slice %46 {offsets = [16, 0], sizes = [128, 4], strides = [1, 1]} : vector<160x4xf32> to vector<128x4xf32>
    %99 = vector.extract_strided_slice %47 {offsets = [1, 2, 0], sizes = [1, 1, 4], strides = [1, 1, 1]} : vector<3x3x4xf32> to vector<1x1x4xf32>
    %100 = vector.shape_cast %99 : vector<1x1x4xf32> to vector<4xf32>
    %101 = vector.shape_cast %100 : vector<4xf32> to vector<1x4xf32>
    %102 = vector.broadcast %101 : vector<1x4xf32> to vector<128x4xf32>
    %103 = arith.mulf %98, %102 : vector<128x4xf32>
    %104 = arith.addf %97, %103 : vector<128x4xf32>
    %105 = vector.extract_strided_slice %46 {offsets = [32, 0], sizes = [128, 4], strides = [1, 1]} : vector<160x4xf32> to vector<128x4xf32>
    %106 = vector.extract_strided_slice %47 {offsets = [2, 2, 0], sizes = [1, 1, 4], strides = [1, 1, 1]} : vector<3x3x4xf32> to vector<1x1x4xf32>
    %107 = vector.shape_cast %106 : vector<1x1x4xf32> to vector<4xf32>
    %108 = vector.shape_cast %107 : vector<4xf32> to vector<1x4xf32>
    %109 = vector.broadcast %108 : vector<1x4xf32> to vector<128x4xf32>
    %110 = arith.mulf %105, %109 : vector<128x4xf32>
    %111 = arith.addf %104, %110 : vector<128x4xf32>
    %c0_25 = arith.constant 0 : index
    %c0_26 = arith.constant 0 : index
    %112 = vector.load %arg6[%c0_25, %c0_26] : memref<4x8xf32, #tpu.memory_space<vmem>>, vector<4x8xf32>
    %cst_27 = arith.constant dense<0.000000e+00> : vector<128x8xf32>
    %113 = tpu.matmul %111, %112, %cst_27 {dimension_numbers = #tpu.dot_dimension_numbers<[1], [0], [0], [1], [0, 0, 1, 1], [], []>} : vector<128x4xf32>, vector<4x8xf32>, vector<128x8xf32> -> vector<128x8xf32>
    %c0_28 = arith.constant 0 : index
    %c0_29 = arith.constant 0 : index
    %114 = vector.load %arg7[%c0_28, %c0_29] : memref<1x8xf32, #tpu.memory_space<vmem>>, vector<1x8xf32>
    %115 = vector.shape_cast %114 : vector<1x8xf32> to vector<8xf32>
    %116 = vector.shape_cast %115 : vector<8xf32> to vector<1x8xf32>
    %117 = vector.broadcast %116 : vector<1x8xf32> to vector<128x8xf32>
    %118 = arith.addf %113, %117 : vector<128x8xf32>
    %119 = vector.shape_cast %118 : vector<128x8xf32> to vector<1x8x16x8xf32>
    %c0_30 = arith.constant 0 : index
    %c0_31 = arith.constant 0 : index
    %c0_32 = arith.constant 0 : index
    %c0_33 = arith.constant 0 : index
    %120 = vector.load %arg8[%c0_30, %c0_31, %c0_32, %c0_33] : memref<1x8x16x8xf32, #tpu.memory_space<vmem>>, vector<1x8x16x8xf32>
    tpu.vector_store %arg8[%c0_30, %c0_31, %c0_32, %c0_33], %119 {strides = array<i32>} : memref<1x8x16x8xf32, #tpu.memory_space<vmem>>, vector<1x8x16x8xf32>,
    return
  }
  func.func @transform_0(%arg0: i32, %arg1: i32) -> (i32, i32, i32, i32) {
    %c0_i32 = arith.constant 0 : i32
    %c0_i32_0 = arith.constant 0 : i32
    %c0_i32_1 = arith.constant 0 : i32
    return %arg0, %arg1, %c0_i32, %c0_i32_0 : i32, i32, i32, i32
  }
  func.func @transform_1(%arg0: i32, %arg1: i32) -> (i32, i32, i32, i32) {
    %c8_i32 = arith.constant 8 : i32
    %0 = arith.muli %arg1, %c8_i32 : i32
    %c1_i32 = arith.constant 1 : i32
    %1 = arith.subi %0, %c1_i32 : i32
    %c0_i32 = arith.constant 0 : i32
    %2 = arith.maxsi %1, %c0_i32 : i32
    %c0_i32_0 = arith.constant 0 : i32
    %c0_i32_1 = arith.constant 0 : i32
    %c0_i32_2 = arith.constant 0 : i32
    return %arg0, %2, %c0_i32_0, %c0_i32_1 : i32, i32, i32, i32
  }
  func.func @transform_2(%arg0: i32, %arg1: i32) -> (i32, i32, i32, i32) {
    %c1_i32 = arith.constant 1 : i32
    %0 = arith.addi %arg1, %c1_i32 : i32
    %c8_i32 = arith.constant 8 : i32
    %1 = arith.muli %0, %c8_i32 : i32
    %c15_i32 = arith.constant 15 : i32
    %2 = arith.minsi %1, %c15_i32 : i32
    %c0_i32 = arith.constant 0 : i32
    %c0_i32_0 = arith.constant 0 : i32
    %c0_i32_1 = arith.constant 0 : i32
    return %arg0, %2, %c0_i32, %c0_i32_0 : i32, i32, i32, i32
  }
  func.func @transform_3(%arg0: i32, %arg1: i32) -> (i32, i32, i32) {
    %c0_i32 = arith.constant 0 : i32
    %c0_i32_0 = arith.constant 0 : i32
    %c0_i32_1 = arith.constant 0 : i32
    %c0_i32_2 = arith.constant 0 : i32
    return %c0_i32, %c0_i32_0, %c0_i32_1 : i32, i32, i32
  }
  func.func @transform_4(%arg0: i32, %arg1: i32) -> (i32, i32) {
    %c0_i32 = arith.constant 0 : i32
    %c0_i32_0 = arith.constant 0 : i32
    %c0_i32_1 = arith.constant 0 : i32
    return %c0_i32, %c0_i32_0 : i32, i32
  }
  func.func @transform_5(%arg0: i32, %arg1: i32) -> (i32, i32) {
    %c0_i32 = arith.constant 0 : i32
    %c0_i32_0 = arith.constant 0 : i32
    %c0_i32_1 = arith.constant 0 : i32
    return %c0_i32, %c0_i32_0 : i32, i32
  }
  func.func @transform_6(%arg0: i32, %arg1: i32) -> (i32, i32, i32, i32) {
    %c0_i32 = arith.constant 0 : i32
    %c0_i32_0 = arith.constant 0 : i32
    %c0_i32_1 = arith.constant 0 : i32
    return %arg0, %arg1, %c0_i32, %c0_i32_0 : i32, i32, i32, i32
  }
}

</mosaic_0001>

<llo_original>
// kernel: tpu_custom_call.1
$region0: #{tpu_custom_call.1}
  #allocation0 [shape = 'u32[]', space=smem, size = 0x4, offset = 0x4, fixed_abs, tag = 'smem constant byte address 0x4 - core index']
  #allocation1 [shape = 'u32[144,128]{1,0:T(1,128)}', space=vmem, size = 0x12000, scoped, tag = 'internal scratch']
  %s0 = inlined_call_operand.vmem [shape: f32[2,16,16,4], index: 0, kind: input, shape index: {}]
  %s1 = inlined_call_operand.vmem [shape: f32[2,16,16,4], index: 1, kind: input, shape index: {}]
  %s2 = inlined_call_operand.vmem [shape: f32[2,16,16,4], index: 2, kind: input, shape index: {}]
  %s3 = inlined_call_operand.vmem [shape: f32[3,3,4], index: 3, kind: input, shape index: {}]
  %s4 = inlined_call_operand.vmem [shape: f32[4,8], index: 4, kind: input, shape index: {}]
  %s5 = inlined_call_operand.vmem [shape: f32[1,8], index: 5, kind: input, shape index: {}]
  %s6 = inlined_call_operand.vmem [shape: f32[2,16,16,8], index: 6, kind: output, shape index: {}]
  %s7 = sld [smem:[#allocation0]]
  $region57: #{tpu_custom_call.1} parent=0
    _
  %s9 = ssub.s32 1, %s7
  %s10 = scalar_select 0, %s9, %s7
  loop: start=0, step=1, limit=6
  $region2: #{tpu_custom_call.1} parent=0 // loop_pre_header
    _
  $region3: #{tpu_custom_call.1} parent=0 // loop_header
    %s12 = sphi 0, %s16
    %p13 = scmp.ge.s32.totalorder %s12, 6
    %s19 = sphi 0, %s31
    %s20 = sphi 0, %s27
    %s21 = sphi 0, %s19
    %s22 = sphi 0, %s20
    %s23 = sphi 0, %s21
    %s24 = sphi 0, %s22
    %s36 = sphi 0, %s38
    %s39 = sphi 0, %s36
    %s40 = sphi 0, %s39
    %s56 = sphi 0, %s40
    %s72 = sphi 0, %s74
    %s75 = sphi 0, %s72
    %s76 = sphi 0, %s75
    %s92 = sphi 0, %s76
    %s108 = sphi 0, %s110
    %s111 = sphi 0, %s108
    %s112 = sphi 0, %s111
    %s128 = sphi 0, %s112
    %s132 = sphi 0, %s132
    %s134 = sphi 0, %s132
    %s135 = sphi 0, %s134
    %s149 = sphi 0, %s135
    %s153 = sphi 0, %s153
    %s155 = sphi 0, %s153
    %s156 = sphi 0, %s155
    %s170 = sphi 0, %s156
    %s174 = sphi 0, %s174
    %s176 = sphi 0, %s174
    %s177 = sphi 0, %s176
    %s191 = sphi 0, %s177
    %s199 = sphi 0, %s201
    %s202 = sphi 0, %s199
    %s203 = sphi 0, %s202
    %s219 = sphi 0, %s203
  $region4: #{tpu_custom_call.1} parent=0 // loop_header_branch
    %15 = sbr.rel (%p13) target = $region8
  $region5: #{tpu_custom_call.1} parent=0 // loop_body
    %s17 = ssub.s32 %s12, 1
    %s18 = ssub.s32 %s12, 2
    %s25 = sadd.s32 1, %s20
    %p26 = scmp.ge.s32.totalorder %s25, 2
    %s27 = scalar_select %p26, 0, %s25
    %s28 = sadd.s32 1, %s19
    %s29 = scalar_select %p26, %s28, %s19
    %p30 = scmp.ge.s32.totalorder %s29, 2
    %s31 = scalar_select %p30, 0, %s29
    %s32 = ssub.s32 %s19, %s31
    %s33 = ssub.s32 %s20, %s27
    %s34 = sor.u32 %s32, %s33
    %p35 = scmp.eq.s32.totalorder %s34, 0
    %s37 = sadd.s32 %s36, 1
    %s38 = scalar_select %p35, %s36, %s37
    %p41 = pneg %p35
    %p42 = scmp.eq.s32.totalorder %s12, 3
    %p43 = por %p41, %p42
    %p44 = scmp.ne.s32.totalorder %s36, %s39
    %p45 = scmp.eq.s32.totalorder %s12, 0
    %p46 = por %p44, %p45
    %p47 = scmp.ne.s32.totalorder %s36, %s39
    %p48 = scmp.eq.s32.totalorder %s17, 3
    %p49 = por %p47, %p48
    %p50 = scmp.ne.s32.totalorder %s39, %s40
    %p51 = scmp.eq.s32.totalorder %s17, 0
    %p52 = por %p50, %p51
    %p53 = scmp.ne.s32.totalorder %s39, %s40
    %p54 = scmp.eq.s32.totalorder %s18, 3
    %p55 = por %p53, %p54
    %p57 = scmp.ne.s32.totalorder %s40, %s56
    %p58 = scmp.eq.s32.totalorder %s18, 0
    %p59 = por %p57, %p58
    %s60 = smul.u32 %s20, 8
    %s61 = ssub.s32 %s60, 1
    %p62 = scmp.gt.s32.totalorder %s61, 0
    %s63 = scalar_select %p62, %s61, 0
    %s64 = smul.u32 %s27, 8
    %s65 = ssub.s32 %s64, 1
    %p66 = scmp.gt.s32.totalorder %s65, 0
    %s67 = scalar_select %p66, %s65, 0
    %s68 = ssub.s32 %s19, %s31
    %s69 = ssub.s32 %s63, %s67
    %s70 = sor.u32 %s68, %s69
    %p71 = scmp.eq.s32.totalorder %s70, 0
    %s73 = sadd.s32 %s72, 1
    %s74 = scalar_select %p71, %s72, %s73
    %p77 = pneg %p71
    %p78 = scmp.eq.s32.totalorder %s12, 3
    %p79 = por %p77, %p78
    %p80 = scmp.ne.s32.totalorder %s72, %s75
    %p81 = scmp.eq.s32.totalorder %s12, 0
    %p82 = por %p80, %p81
    %p83 = scmp.ne.s32.totalorder %s72, %s75
    %p84 = scmp.eq.s32.totalorder %s17, 3
    %p85 = por %p83, %p84
    %p86 = scmp.ne.s32.totalorder %s75, %s76
    %p87 = scmp.eq.s32.totalorder %s17, 0
    %p88 = por %p86, %p87
    %p89 = scmp.ne.s32.totalorder %s75, %s76
    %p90 = scmp.eq.s32.totalorder %s18, 3
    %p91 = por %p89, %p90
    %p93 = scmp.ne.s32.totalorder %s76, %s92
    %p94 = scmp.eq.s32.totalorder %s18, 0
    %p95 = por %p93, %p94
    %s96 = sadd.s32 %s20, 1
    %s97 = smul.u32 %s96, 8
    %p98 = scmp.lt.s32.totalorder %s97, 15
    %s99 = scalar_select %p98, %s97, 15
    %s100 = sadd.s32 %s27, 1
    %s101 = smul.u32 %s100, 8
    %p102 = scmp.lt.s32.totalorder %s101, 15
    %s103 = scalar_select %p102, %s101, 15
    %s104 = ssub.s32 %s19, %s31
    %s105 = ssub.s32 %s99, %s103
    %s106 = sor.u32 %s104, %s105
    %p107 = scmp.eq.s32.totalorder %s106, 0
    %s109 = sadd.s32 %s108, 1
    %s110 = scalar_select %p107, %s108, %s109
    %p113 = pneg %p107
    %p114 = scmp.eq.s32.totalorder %s12, 3
    %p115 = por %p113, %p114
    %p116 = scmp.ne.s32.totalorder %s108, %s111
    %p117 = scmp.eq.s32.totalorder %s12, 0
    %p118 = por %p116, %p117
    %p119 = scmp.ne.s32.totalorder %s108, %s111
    %p120 = scmp.eq.s32.totalorder %s17, 3
    %p121 = por %p119, %p120
    %p122 = scmp.ne.s32.totalorder %s111, %s112
    %p123 = scmp.eq.s32.totalorder %s17, 0
    %p124 = por %p122, %p123
    %p125 = scmp.ne.s32.totalorder %s111, %s112
    %p126 = scmp.eq.s32.totalorder %s18, 3
    %p127 = por %p125, %p126
    %p129 = scmp.ne.s32.totalorder %s112, %s128
    %p130 = scmp.eq.s32.totalorder %s18, 0
    %p131 = por %p129, %p130
    %s133 = sadd.s32 %s132, 1
    %p136 = scmp.eq.s32.totalorder %s12, 3
    %p137 = scmp.ne.s32.totalorder %s132, %s134
    %p138 = scmp.eq.s32.totalorder %s12, 0
    %p139 = por %p137, %p138
    %p140 = scmp.ne.s32.totalorder %s132, %s134
    %p141 = scmp.eq.s32.totalorder %s17, 3
    %p142 = por %p140, %p141
    %p143 = scmp.ne.s32.totalorder %s134, %s135
    %p144 = scmp.eq.s32.totalorder %s17, 0
    %p145 = por %p143, %p144
    %p146 = scmp.ne.s32.totalorder %s134, %s135
    %p147 = scmp.eq.s32.totalorder %s18, 3
    %p148 = por %p146, %p147
    %p150 = scmp.ne.s32.totalorder %s135, %s149
    %p151 = scmp.eq.s32.totalorder %s18, 0
    %p152 = por %p150, %p151
    %s154 = sadd.s32 %s153, 1
    %p157 = scmp.eq.s32.totalorder %s12, 3
    %p158 = scmp.ne.s32.totalorder %s153, %s155
    %p159 = scmp.eq.s32.totalorder %s12, 0
    %p160 = por %p158, %p159
    %p161 = scmp.ne.s32.totalorder %s153, %s155
    %p162 = scmp.eq.s32.totalorder %s17, 3
    %p163 = por %p161, %p162
    %p164 = scmp.ne.s32.totalorder %s155, %s156
    %p165 = scmp.eq.s32.totalorder %s17, 0
    %p166 = por %p164, %p165
    %p167 = scmp.ne.s32.totalorder %s155, %s156
    %p168 = scmp.eq.s32.totalorder %s18, 3
    %p169 = por %p167, %p168
    %p171 = scmp.ne.s32.totalorder %s156, %s170
    %p172 = scmp.eq.s32.totalorder %s18, 0
    %p173 = por %p171, %p172
    %s175 = sadd.s32 %s174, 1
    %p178 = scmp.eq.s32.totalorder %s12, 3
    %p179 = scmp.ne.s32.totalorder %s174, %s176
    %p180 = scmp.eq.s32.totalorder %s12, 0
    %p181 = por %p179, %p180
    %p182 = scmp.ne.s32.totalorder %s174, %s176
    %p183 = scmp.eq.s32.totalorder %s17, 3
    %p184 = por %p182, %p183
    %p185 = scmp.ne.s32.totalorder %s176, %s177
    %p186 = scmp.eq.s32.totalorder %s17, 0
    %p187 = por %p185, %p186
    %p188 = scmp.ne.s32.totalorder %s176, %s177
    %p189 = scmp.eq.s32.totalorder %s18, 3
    %p190 = por %p188, %p189
    %p192 = scmp.ne.s32.totalorder %s177, %s191
    %p193 = scmp.eq.s32.totalorder %s18, 0
    %p194 = por %p192, %p193
    %s195 = ssub.s32 %s19, %s31
    %s196 = ssub.s32 %s20, %s27
    %s197 = sor.u32 %s195, %s196
    %p198 = scmp.eq.s32.totalorder %s197, 0
    %s200 = sadd.s32 %s199, 1
    %s201 = scalar_select %p198, %s199, %s200
    %p204 = pneg %p198
    %p205 = scmp.eq.s32.totalorder %s12, 3
    %p206 = por %p204, %p205
    %p207 = scmp.ne.s32.totalorder %s199, %s202
    %p208 = scmp.eq.s32.totalorder %s12, 0
    %p209 = por %p207, %p208
    %p210 = scmp.ne.s32.totalorder %s199, %s202
    %p211 = scmp.eq.s32.totalorder %s17, 3
    %p212 = por %p210, %p211
    %p213 = scmp.ne.s32.totalorder %s202, %s203
    %p214 = scmp.eq.s32.totalorder %s17, 0
    %p215 = por %p213, %p214
    %p216 = scmp.ne.s32.totalorder %s202, %s203
    %p217 = scmp.eq.s32.totalorder %s18, 3
    %p218 = por %p216, %p217
    %p220 = scmp.ne.s32.totalorder %s203, %s219
    %p221 = scmp.eq.s32.totalorder %s18, 0
    %p222 = por %p220, %p221
    %p223 = scmp.le.s32.totalorder 1, %s12
    %p224 = scmp.lt.s32.totalorder %s12, 5
    %p225 = pnand %p223, %p224
    %p226 = pneg %p225
    // Predicated region
    $region9: #{tpu_custom_call.1} parent=5 // pred_check
      _
    $region10: #{tpu_custom_call.1} parent=5 // pred_check_branch
      %228 = sbr.rel (%p225) target = $region12
    $region11: #{tpu_custom_call.1} parent=5 // pred_region
      %s229 = ssub.s32 %s12, 1
      // Predicated region
      $region13: #{tpu_custom_call.1} parent=11 // pred_check
        %p230 = pneg %p145
      $region14: #{tpu_custom_call.1} parent=11 // pred_check_branch
        %232 = sbr.rel (%p230) target = $region16
      $region15: #{tpu_custom_call.1} parent=11 // pred_region
        _
      $region16: #{tpu_custom_call.1} parent=11 // pred_fallthru
        _
      // Predicated region
      $region17: #{tpu_custom_call.1} parent=11 // pred_check
        %p233 = pneg %p166
      $region18: #{tpu_custom_call.1} parent=11 // pred_check_branch
        %235 = sbr.rel (%p233) target = $region20
      $region19: #{tpu_custom_call.1} parent=11 // pred_region
        _
      $region20: #{tpu_custom_call.1} parent=11 // pred_fallthru
        _
      // Predicated region
      $region21: #{tpu_custom_call.1} parent=11 // pred_check
        %p236 = pneg %p187
      $region22: #{tpu_custom_call.1} parent=11 // pred_check_branch
        %238 = sbr.rel (%p236) target = $region24
      $region23: #{tpu_custom_call.1} parent=11 // pred_region
        _
      $region24: #{tpu_custom_call.1} parent=11 // pred_fallthru
        _
    $region12: #{tpu_custom_call.1} parent=5 // pred_fallthru
      _
    %p239 = scmp.lt.s32.totalorder %s12, 4
    // Predicated region
    $region25: #{tpu_custom_call.1} parent=5 // pred_check
      %p240 = pneg %p239
    $region26: #{tpu_custom_call.1} parent=5 // pred_check_branch
      %242 = sbr.rel (%p240) target = $region28
    $region27: #{tpu_custom_call.1} parent=5 // pred_region
      // Predicated region
      $region29: #{tpu_custom_call.1} parent=27 // pred_check
        %p243 = pneg %p46
      $region30: #{tpu_custom_call.1} parent=27 // pred_check_branch
        %245 = sbr.rel (%p243) target = $region32
      $region31: #{tpu_custom_call.1} parent=27 // pred_region
        %s246 = smul.u32 8, %s20
        %p247 = scmp.lt.s32.totalorder %s19, 1
        %s248 = scalar_select %p247, %s19, 1
        %p249 = scmp.lt.s32.totalorder %s246, 15
        %s250 = scalar_select %p249, %s246, 15
        %s251 = smul.addr %s250, 2
        %s252 = smul.addr %s248, 32
        %s253 = sadd.s32 %s251, %s252
        %s254 = smul.addr %s253, 8
        %s255 = scalar_lea.vmem %s0, %s254
        %s256 = smul.u32 8, %s20
      $region32: #{tpu_custom_call.1} parent=27 // pred_fallthru
        _
      // Predicated region
      $region33: #{tpu_custom_call.1} parent=27 // pred_check
        %p257 = pneg %p82
      $region34: #{tpu_custom_call.1} parent=27 // pred_check_branch
        %259 = sbr.rel (%p257) target = $region36
      $region35: #{tpu_custom_call.1} parent=27 // pred_region
        %s260 = smul.u32 %s20, 8
        %s261 = ssub.s32 %s260, 1
        %p262 = scmp.gt.s32.totalorder %s261, 0
        %s263 = scalar_select %p262, %s261, 0
        %p264 = scmp.lt.s32.totalorder %s19, 1
        %s265 = scalar_select %p264, %s19, 1
        %p266 = scmp.lt.s32.totalorder %s263, 15
        %s267 = scalar_select %p266, %s263, 15
        %s268 = smul.addr %s267, 2
        %s269 = smul.addr %s265, 32
        %s270 = sadd.s32 %s268, %s269
        %s271 = smul.addr %s270, 8
        %s272 = scalar_lea.vmem %s1, %s271
        %s273 = smul.u32 %s20, 8
        %s274 = ssub.s32 %s273, 1
        %p275 = scmp.gt.s32.totalorder %s274, 0
        %s276 = scalar_select %p275, %s274, 0
      $region36: #{tpu_custom_call.1} parent=27 // pred_fallthru
        _
      // Predicated region
      $region37: #{tpu_custom_call.1} parent=27 // pred_check
        %p277 = pneg %p118
      $region38: #{tpu_custom_call.1} parent=27 // pred_check_branch
        %279 = sbr.rel (%p277) target = $region40
      $region39: #{tpu_custom_call.1} parent=27 // pred_region
        %s280 = sadd.s32 %s20, 1
        %s281 = smul.u32 %s280, 8
        %p282 = scmp.lt.s32.totalorder %s281, 15
        %s283 = scalar_select %p282, %s281, 15
        %p284 = scmp.lt.s32.totalorder %s19, 1
        %s285 = scalar_select %p284, %s19, 1
        %p286 = scmp.lt.s32.totalorder %s283, 15
        %s287 = scalar_select %p286, %s283, 15
        %s288 = smul.addr %s287, 2
        %s289 = smul.addr %s285, 32
        %s290 = sadd.s32 %s288, %s289
        %s291 = smul.addr %s290, 8
        %s292 = scalar_lea.vmem %s2, %s291
        %s293 = sadd.s32 %s20, 1
        %s294 = smul.u32 %s293, 8
        %p295 = scmp.lt.s32.totalorder %s294, 15
        %s296 = scalar_select %p295, %s294, 15
      $region40: #{tpu_custom_call.1} parent=27 // pred_fallthru
        _
    $region28: #{tpu_custom_call.1} parent=5 // pred_fallthru
      _
    %p297 = scmp.le.s32.totalorder 1, %s12
    %p298 = scmp.lt.s32.totalorder %s12, 5
    %p299 = pnand %p297, %p298
    %p300 = pneg %p299
    // Predicated region
    $region41: #{tpu_custom_call.1} parent=5 // pred_check
      _
    $region42: #{tpu_custom_call.1} parent=5 // pred_check_branch
      %302 = sbr.rel (%p299) target = $region44
    $region43: #{tpu_custom_call.1} parent=5 // pred_region
      %s303 = ssub.s32 %s12, 1
      %s304 = smul.u32 8, %s22
      %p305 = scmp.lt.s32.totalorder %s21, 1
      %s306 = scalar_select %p305, %s21, 1
      %p307 = scmp.lt.s32.totalorder %s304, 15
      %s308 = scalar_select %p307, %s304, 15
      %s309 = smul.addr %s308, 2
      %s310 = smul.addr %s306, 32
      %s311 = sadd.s32 %s309, %s310
      %s312 = smul.addr %s311, 8
      %s313 = scalar_lea.vmem %s0, %s312
      %p314 = pneg %p52
      %p315 = pneg %p49
      %s316 = smul.u32 %s22, 8
      %s317 = ssub.s32 %s316, 1
      %p318 = scmp.gt.s32.totalorder %s317, 0
      %s319 = scalar_select %p318, %s317, 0
      %p320 = scmp.lt.s32.totalorder %s21, 1
      %s321 = scalar_select %p320, %s21, 1
      %p322 = scmp.lt.s32.totalorder %s319, 15
      %s323 = scalar_select %p322, %s319, 15
      %s324 = smul.addr %s323, 2
      %s325 = smul.addr %s321, 32
      %s326 = sadd.s32 %s324, %s325
      %s327 = smul.addr %s326, 8
      %s328 = scalar_lea.vmem %s1, %s327
      %p329 = pneg %p88
      %p330 = pneg %p85
      %s331 = sadd.s32 %s22, 1
      %s332 = smul.u32 %s331, 8
      %p333 = scmp.lt.s32.totalorder %s332, 15
      %s334 = scalar_select %p333, %s332, 15
      %p335 = scmp.lt.s32.totalorder %s21, 1
      %s336 = scalar_select %p335, %s21, 1
      %p337 = scmp.lt.s32.totalorder %s334, 15
      %s338 = scalar_select %p337, %s334, 15
      %s339 = smul.addr %s338, 2
      %s340 = smul.addr %s336, 32
      %s341 = sadd.s32 %s339, %s340
      %s342 = smul.addr %s341, 8
      %s343 = scalar_lea.vmem %s2, %s342
      %p344 = pneg %p124
      %p345 = pneg %p121
      %p346 = pneg %p145
      %p347 = pneg %p142
      %p348 = pneg %p166
      %p349 = pneg %p163
      %p350 = pneg %p187
      %p351 = pneg %p184
      %p352 = pneg %p215
      %p353 = pneg %p212
      %s354 = smul.u32 8, %s22
      %p355 = scmp.lt.s32.totalorder %s21, 1
      %s356 = scalar_select %p355, %s21, 1
      %p357 = scmp.lt.s32.totalorder %s354, 15
      %s358 = scalar_select %p357, %s354, 15
      %s359 = smul.addr %s358, 2
      %s360 = smul.addr %s356, 32
      %s361 = sadd.s32 %s359, %s360
      %s362 = smul.addr %s361, 8
      %s363 = scalar_lea.vmem %s6, %s362
      %s364 = smul.u32 8, %s22
      %p365 = scmp.lt.s32.totalorder %s21, 1
      %s366 = scalar_select %p365, %s21, 1
      %p367 = scmp.lt.s32.totalorder %s364, 15
      %s368 = scalar_select %p367, %s364, 15
      %s369 = smul.addr %s368, 2
      %s370 = smul.addr %s366, 32
      %s371 = sadd.s32 %s369, %s370
      %s372 = smul.addr %s371, 8
      %s373 = scalar_lea.vmem %s0, %s372
      %s374 = smul.u32 8, %s22
      %s375 = smul.u32 %s22, 8
      %s376 = ssub.s32 %s375, 1
      %p377 = scmp.gt.s32.totalorder %s376, 0
      %s378 = scalar_select %p377, %s376, 0
      %p379 = scmp.lt.s32.totalorder %s21, 1
      %s380 = scalar_select %p379, %s21, 1
      %p381 = scmp.lt.s32.totalorder %s378, 15
      %s382 = scalar_select %p381, %s378, 15
      %s383 = smul.addr %s382, 2
      %s384 = smul.addr %s380, 32
      %s385 = sadd.s32 %s383, %s384
      %s386 = smul.addr %s385, 8
      %s387 = scalar_lea.vmem %s1, %s386
      %s388 = smul.u32 %s22, 8
      %s389 = ssub.s32 %s388, 1
      %p390 = scmp.gt.s32.totalorder %s389, 0
      %s391 = scalar_select %p390, %s389, 0
      %s392 = sadd.s32 %s22, 1
      %s393 = smul.u32 %s392, 8
      %p394 = scmp.lt.s32.totalorder %s393, 15
      %s395 = scalar_select %p394, %s393, 15
      %p396 = scmp.lt.s32.totalorder %s21, 1
      %s397 = scalar_select %p396, %s21, 1
      %p398 = scmp.lt.s32.totalorder %s395, 15
      %s399 = scalar_select %p398, %s395, 15
      %s400 = smul.addr %s399, 2
      %s401 = smul.addr %s397, 32
      %s402 = sadd.s32 %s400, %s401
      %s403 = smul.addr %s402, 8
      %s404 = scalar_lea.vmem %s2, %s403
      %s405 = sadd.s32 %s22, 1
      %s406 = smul.u32 %s405, 8
      %p407 = scmp.lt.s32.totalorder %s406, 15
      %s408 = scalar_select %p407, %s406, 15
      %s409 = smul.u32 8, %s22
      %p410 = scmp.lt.s32.totalorder %s21, 1
      %s411 = scalar_select %p410, %s21, 1
      %p412 = scmp.lt.s32.totalorder %s409, 15
      %s413 = scalar_select %p412, %s409, 15
      %s414 = smul.addr %s413, 2
      %s415 = smul.addr %s411, 32
      %s416 = sadd.s32 %s414, %s415
      %s417 = smul.addr %s416, 8
      %s418 = scalar_lea.vmem %s6, %s417
      %s419 = smul.u32 8, %s22
      %v420 = vld [vmem:[%s373] sm:$0xff]
      %v421 = vld [vmem:[%s373 + $0x8] sm:$0xff]
      %v422 = vld [vmem:[%s373 + $0x10] sm:$0xff]
      %v423 = vld [vmem:[%s373 + $0x18] sm:$0xff]
      %v424 = vld [vmem:[%s373 + $0x20] sm:$0xff]
      %v425 = vld [vmem:[%s373 + $0x28] sm:$0xff]
      %v426 = vld [vmem:[%s373 + $0x30] sm:$0xff]
      %v427 = vld [vmem:[%s373 + $0x38] sm:$0xff]
      %v428 = vld [vmem:[%s373 + $0x40] sm:$0xff]
      %v429 = vld [vmem:[%s373 + $0x48] sm:$0xff]
      %v430 = vld [vmem:[%s373 + $0x50] sm:$0xff]
      %v431 = vld [vmem:[%s373 + $0x58] sm:$0xff]
      %v432 = vld [vmem:[%s373 + $0x60] sm:$0xff]
      %v433 = vld [vmem:[%s373 + $0x68] sm:$0xff]
      %v434 = vld [vmem:[%s373 + $0x70] sm:$0xff]
      %v435 = vld [vmem:[%s373 + $0x78] sm:$0xff]
      %p436 = scmp.gt.s32.totalorder %s22, 0
      %v437 = vld [vmem:[%s387] sm:$0xff]
      %v438 = vld [vmem:[%s387 + $0x8] sm:$0xff]
      %s439 = scalar_select %p436, 1, 0
      %v440 = vstv %s439
      %vm441 = vcmp.eq.s32.totalorder %v440, 1
      %v442 = vsel %vm441, %v437, 0.0
      %v443 = vsel %vm441, %v438, 0.0
      %p444 = scmp.lt.s32.totalorder %s22, 1
      %v445 = vld [vmem:[%s404] sm:$0xff]
      %v446 = vld [vmem:[%s404 + $0x8] sm:$0xff]
      %s447 = scalar_select %p444, 1, 0
      %v448 = vstv %s447
      %vm449 = vcmp.eq.s32.totalorder %v448, 1
      %v450 = vsel %vm449, %v445, 0.0
      %v451 = vsel %vm449, %v446, 0.0
      %vm454 = vcmask 1040384
      %v455 = vrot.slane %v442, 7
      %v456 = vrot.slane %v443, 7
      %v457 = vsel %vm454, %v455, %v456
      %v477 = vrot.slane %v420, 7
      %v478 = vrot.slane %v421, 7
      %v479 = vsel %vm454, %v477, %v478
      %v480 = vrot.slane %v422, 7
      %v481 = vsel %vm454, %v478, %v480
      %v482 = vrot.slane %v423, 7
      %v483 = vsel %vm454, %v480, %v482
      %v484 = vrot.slane %v424, 7
      %v485 = vsel %vm454, %v482, %v484
      %v486 = vrot.slane %v425, 7
      %v487 = vsel %vm454, %v484, %v486
      %v488 = vrot.slane %v426, 7
      %v489 = vsel %vm454, %v486, %v488
      %v490 = vrot.slane %v427, 7
      %v491 = vsel %vm454, %v488, %v490
      %v492 = vrot.slane %v428, 7
      %v493 = vsel %vm454, %v490, %v492
      %v494 = vrot.slane %v429, 7
      %v495 = vsel %vm454, %v492, %v494
      %v496 = vrot.slane %v430, 7
      %v497 = vsel %vm454, %v494, %v496
      %v498 = vrot.slane %v431, 7
      %v499 = vsel %vm454, %v496, %v498
      %v500 = vrot.slane %v432, 7
      %v501 = vsel %vm454, %v498, %v500
      %v502 = vrot.slane %v433, 7
      %v503 = vsel %vm454, %v500, %v502
      %v504 = vrot.slane %v434, 7
      %v505 = vsel %vm454, %v502, %v504
      %v506 = vrot.slane %v435, 7
      %v507 = vsel %vm454, %v504, %v506
      %v527 = vrot.slane %v450, 7
      %v528 = vrot.slane %v451, 7
      %v529 = vsel %vm454, %v527, %v528
      %v533 = vsel %vm454, 0.0, %v455
      %v534 = vsel %vm454, %v456, %v477
      %v535 = vsel %vm454, %v506, %v527
      %v536 = vsel %vm454, %v528, 0.0
      %v537 = vlaneseq
      %v538 = vshrl.u32 %v537, 7
      %v539 = vadd.s32 %v538, 8
      %v540 = vadd.s32 %v538, 16
      %v541 = vadd.s32 %v538, 24
      %v542 = vadd.s32 %v538, 32
      %v543 = vadd.s32 %v538, 40
      %v544 = vadd.s32 %v538, 48
      %v545 = vadd.s32 %v538, 56
      %v546 = vadd.s32 %v538, 64
      %v547 = vadd.s32 %v538, 72
      %v548 = vadd.s32 %v538, 80
      %v549 = vadd.s32 %v538, 88
      %v550 = vadd.s32 %v538, 96
      %v551 = vadd.s32 %v538, 104
      %v552 = vadd.s32 %v538, 112
      %v553 = vadd.s32 %v538, 120
      %v554 = vadd.s32 %v538, 128
      %v555 = vadd.s32 %v538, 136
      %v556 = vadd.s32 %v538, 144
      %v557 = vadd.s32 %v538, 152
      %vm558 = vcmp.lt.s32.totalorder %v538, 0
      %v559 = vsub.s32 0, %v538
      %v560 = vsel %vm558, %v559, %v538
      %v561 = vshrl.u32 %v560, 4
      %v562 = vand.u32 %v560, 15
      %v563 = vsub.s32 0, %v562
      %v564 = vsel %vm558, %v563, %v562
      %vm565 = vcmp.lt.s32.totalorder %v539, 0
      %v566 = vsub.s32 0, %v539
      %v567 = vsel %vm565, %v566, %v539
      %v568 = vshrl.u32 %v567, 4
      %v569 = vand.u32 %v567, 15
      %v570 = vsub.s32 0, %v569
      %v571 = vsel %vm565, %v570, %v569
      %vm572 = vcmp.lt.s32.totalorder %v540, 0
      %v573 = vsub.s32 0, %v540
      %v574 = vsel %vm572, %v573, %v540
      %v575 = vshrl.u32 %v574, 4
      %v576 = vand.u32 %v574, 15
      %v577 = vsub.s32 0, %v576
      %v578 = vsel %vm572, %v577, %v576
      %vm579 = vcmp.lt.s32.totalorder %v541, 0
      %v580 = vsub.s32 0, %v541
      %v581 = vsel %vm579, %v580, %v541
      %v582 = vshrl.u32 %v581, 4
      %v583 = vand.u32 %v581, 15
      %v584 = vsub.s32 0, %v583
      %v585 = vsel %vm579, %v584, %v583
      %vm586 = vcmp.lt.s32.totalorder %v542, 0
      %v587 = vsub.s32 0, %v542
      %v588 = vsel %vm586, %v587, %v542
      %v589 = vshrl.u32 %v588, 4
      %v590 = vand.u32 %v588, 15
      %v591 = vsub.s32 0, %v590
      %v592 = vsel %vm586, %v591, %v590
      %vm593 = vcmp.lt.s32.totalorder %v543, 0
      %v594 = vsub.s32 0, %v543
      %v595 = vsel %vm593, %v594, %v543
      %v596 = vshrl.u32 %v595, 4
      %v597 = vand.u32 %v595, 15
      %v598 = vsub.s32 0, %v597
      %v599 = vsel %vm593, %v598, %v597
      %vm600 = vcmp.lt.s32.totalorder %v544, 0
      %v601 = vsub.s32 0, %v544
      %v602 = vsel %vm600, %v601, %v544
      %v603 = vshrl.u32 %v602, 4
      %v604 = vand.u32 %v602, 15
      %v605 = vsub.s32 0, %v604
      %v606 = vsel %vm600, %v605, %v604
      %vm607 = vcmp.lt.s32.totalorder %v545, 0
      %v608 = vsub.s32 0, %v545
      %v609 = vsel %vm607, %v608, %v545
      %v610 = vshrl.u32 %v609, 4
      %v611 = vand.u32 %v609, 15
      %v612 = vsub.s32 0, %v611
      %v613 = vsel %vm607, %v612, %v611
      %vm614 = vcmp.lt.s32.totalorder %v546, 0
      %v615 = vsub.s32 0, %v546
      %v616 = vsel %vm614, %v615, %v546
      %v617 = vshrl.u32 %v616, 4
      %v618 = vand.u32 %v616, 15
      %v619 = vsub.s32 0, %v618
      %v620 = vsel %vm614, %v619, %v618
      %vm621 = vcmp.lt.s32.totalorder %v547, 0
      %v622 = vsub.s32 0, %v547
      %v623 = vsel %vm621, %v622, %v547
      %v624 = vshrl.u32 %v623, 4
      %v625 = vand.u32 %v623, 15
      %v626 = vsub.s32 0, %v625
      %v627 = vsel %vm621, %v626, %v625
      %vm628 = vcmp.lt.s32.totalorder %v548, 0
      %v629 = vsub.s32 0, %v548
      %v630 = vsel %vm628, %v629, %v548
      %v631 = vshrl.u32 %v630, 4
      %v632 = vand.u32 %v630, 15
      %v633 = vsub.s32 0, %v632
      %v634 = vsel %vm628, %v633, %v632
      %vm635 = vcmp.lt.s32.totalorder %v549, 0
      %v636 = vsub.s32 0, %v549
      %v637 = vsel %vm635, %v636, %v549
      %v638 = vshrl.u32 %v637, 4
      %v639 = vand.u32 %v637, 15
      %v640 = vsub.s32 0, %v639
      %v641 = vsel %vm635, %v640, %v639
      %vm642 = vcmp.lt.s32.totalorder %v550, 0
      %v643 = vsub.s32 0, %v550
      %v644 = vsel %vm642, %v643, %v550
      %v645 = vshrl.u32 %v644, 4
      %v646 = vand.u32 %v644, 15
      %v647 = vsub.s32 0, %v646
      %v648 = vsel %vm642, %v647, %v646
      %vm649 = vcmp.lt.s32.totalorder %v551, 0
      %v650 = vsub.s32 0, %v551
      %v651 = vsel %vm649, %v650, %v551
      %v652 = vshrl.u32 %v651, 4
      %v653 = vand.u32 %v651, 15
      %v654 = vsub.s32 0, %v653
      %v655 = vsel %vm649, %v654, %v653
      %vm656 = vcmp.lt.s32.totalorder %v552, 0
      %v657 = vsub.s32 0, %v552
      %v658 = vsel %vm656, %v657, %v552
      %v659 = vshrl.u32 %v658, 4
      %v660 = vand.u32 %v658, 15
      %v661 = vsub.s32 0, %v660
      %v662 = vsel %vm656, %v661, %v660
      %vm663 = vcmp.lt.s32.totalorder %v553, 0
      %v664 = vsub.s32 0, %v553
      %v665 = vsel %vm663, %v664, %v553
      %v666 = vshrl.u32 %v665, 4
      %v667 = vand.u32 %v665, 15
      %v668 = vsub.s32 0, %v667
      %v669 = vsel %vm663, %v668, %v667
      %vm670 = vcmp.lt.s32.totalorder %v554, 0
      %v671 = vsub.s32 0, %v554
      %v672 = vsel %vm670, %v671, %v554
      %v673 = vshrl.u32 %v672, 4
      %v674 = vand.u32 %v672, 15
      %v675 = vsub.s32 0, %v674
      %v676 = vsel %vm670, %v675, %v674
      %vm677 = vcmp.lt.s32.totalorder %v555, 0
      %v678 = vsub.s32 0, %v555
      %v679 = vsel %vm677, %v678, %v555
      %v680 = vshrl.u32 %v679, 4
      %v681 = vand.u32 %v679, 15
      %v682 = vsub.s32 0, %v681
      %v683 = vsel %vm677, %v682, %v681
      %vm684 = vcmp.lt.s32.totalorder %v556, 0
      %v685 = vsub.s32 0, %v556
      %v686 = vsel %vm684, %v685, %v556
      %v687 = vshrl.u32 %v686, 4
      %v688 = vand.u32 %v686, 15
      %v689 = vsub.s32 0, %v688
      %v690 = vsel %vm684, %v689, %v688
      %vm691 = vcmp.lt.s32.totalorder %v557, 0
      %v692 = vsub.s32 0, %v557
      %v693 = vsel %vm691, %v692, %v557
      %v694 = vshrl.u32 %v693, 4
      %v695 = vand.u32 %v693, 15
      %v696 = vsub.s32 0, %v695
      %v697 = vsel %vm691, %v696, %v695
      %vm698 = vcmp.ne.s32.totalorder %v564, 0
      %vm699 = vcmp.ne.s32.totalorder %v571, 0
      %vm700 = vcmp.ne.s32.totalorder %v578, 0
      %vm701 = vcmp.ne.s32.totalorder %v585, 0
      %vm702 = vcmp.ne.s32.totalorder %v592, 0
      %vm703 = vcmp.ne.s32.totalorder %v599, 0
      %vm704 = vcmp.ne.s32.totalorder %v606, 0
      %vm705 = vcmp.ne.s32.totalorder %v613, 0
      %vm706 = vcmp.ne.s32.totalorder %v620, 0
      %vm707 = vcmp.ne.s32.totalorder %v627, 0
      %vm708 = vcmp.ne.s32.totalorder %v634, 0
      %vm709 = vcmp.ne.s32.totalorder %v641, 0
      %vm710 = vcmp.ne.s32.totalorder %v648, 0
      %vm711 = vcmp.ne.s32.totalorder %v655, 0
      %vm712 = vcmp.ne.s32.totalorder %v662, 0
      %vm713 = vcmp.ne.s32.totalorder %v669, 0
      %vm714 = vcmp.ne.s32.totalorder %v676, 0
      %vm715 = vcmp.ne.s32.totalorder %v683, 0
      %vm716 = vcmp.ne.s32.totalorder %v690, 0
      %vm717 = vcmp.ne.s32.totalorder %v697, 0
      %vm718 = vcmp.lt.s32.totalorder %v564, 0
      %vm719 = vcmp.lt.s32.totalorder %v571, 0
      %vm720 = vcmp.lt.s32.totalorder %v578, 0
      %vm721 = vcmp.lt.s32.totalorder %v585, 0
      %vm722 = vcmp.lt.s32.totalorder %v592, 0
      %vm723 = vcmp.lt.s32.totalorder %v599, 0
      %vm724 = vcmp.lt.s32.totalorder %v606, 0
      %vm725 = vcmp.lt.s32.totalorder %v613, 0
      %vm726 = vcmp.lt.s32.totalorder %v620, 0
      %vm727 = vcmp.lt.s32.totalorder %v627, 0
      %vm728 = vcmp.lt.s32.totalorder %v634, 0
      %vm729 = vcmp.lt.s32.totalorder %v641, 0
      %vm730 = vcmp.lt.s32.totalorder %v648, 0
      %vm731 = vcmp.lt.s32.totalorder %v655, 0
      %vm732 = vcmp.lt.s32.totalorder %v662, 0
      %vm733 = vcmp.lt.s32.totalorder %v669, 0
      %vm734 = vcmp.lt.s32.totalorder %v676, 0
      %vm735 = vcmp.lt.s32.totalorder %v683, 0
      %vm736 = vcmp.lt.s32.totalorder %v690, 0
      %vm737 = vcmp.lt.s32.totalorder %v697, 0
      %vm738 = vmand %vm718, %vm698
      %vm739 = vmand %vm719, %vm699
      %vm740 = vmand %vm720, %vm700
      %vm741 = vmand %vm721, %vm701
      %vm742 = vmand %vm722, %vm702
      %vm743 = vmand %vm723, %vm703
      %vm744 = vmand %vm724, %vm704
      %vm745 = vmand %vm725, %vm705
      %vm746 = vmand %vm726, %vm706
      %vm747 = vmand %vm727, %vm707
      %vm748 = vmand %vm728, %vm708
      %vm749 = vmand %vm729, %vm709
      %vm750 = vmand %vm730, %vm710
      %vm751 = vmand %vm731, %vm711
      %vm752 = vmand %vm732, %vm712
      %vm753 = vmand %vm733, %vm713
      %vm754 = vmand %vm734, %vm714
      %vm755 = vmand %vm735, %vm715
      %vm756 = vmand %vm736, %vm716
      %vm757 = vmand %vm737, %vm717
      %v758 = vadd.s32 %v564, 16
      %v759 = vadd.s32 %v571, 16
      %v760 = vadd.s32 %v578, 16
      %v761 = vadd.s32 %v585, 16
      %v762 = vadd.s32 %v592, 16
      %v763 = vadd.s32 %v599, 16
      %v764 = vadd.s32 %v606, 16
      %v765 = vadd.s32 %v613, 16
      %v766 = vadd.s32 %v620, 16
      %v767 = vadd.s32 %v627, 16
      %v768 = vadd.s32 %v634, 16
      %v769 = vadd.s32 %v641, 16
      %v770 = vadd.s32 %v648, 16
      %v771 = vadd.s32 %v655, 16
      %v772 = vadd.s32 %v662, 16
      %v773 = vadd.s32 %v669, 16
      %v774 = vadd.s32 %v676, 16
      %v775 = vadd.s32 %v683, 16
      %v776 = vadd.s32 %v690, 16
      %v777 = vadd.s32 %v697, 16
      %v778 = vsel %vm738, %v758, %v564
      %v779 = vsel %vm739, %v759, %v571
      %v780 = vsel %vm740, %v760, %v578
      %v781 = vsel %vm741, %v761, %v585
      %v782 = vsel %vm742, %v762, %v592
      %v783 = vsel %vm743, %v763, %v599
      %v784 = vsel %vm744, %v764, %v606
      %v785 = vsel %vm745, %v765, %v613
      %v786 = vsel %vm746, %v766, %v620
      %v787 = vsel %vm747, %v767, %v627
      %v788 = vsel %vm748, %v768, %v634
      %v789 = vsel %vm749, %v769, %v641
      %v790 = vsel %vm750, %v770, %v648
      %v791 = vsel %vm751, %v771, %v655
      %v792 = vsel %vm752, %v772, %v662
      %v793 = vsel %vm753, %v773, %v669
      %v794 = vsel %vm754, %v774, %v676
      %v795 = vsel %vm755, %v775, %v683
      %v796 = vsel %vm756, %v776, %v690
      %v797 = vsel %vm757, %v777, %v697
      %vm798 = vcmp.ge.s32.totalorder %v778, 1
      %vm799 = vcmp.ge.s32.totalorder %v779, 1
      %vm800 = vcmp.ge.s32.totalorder %v780, 1
      %vm801 = vcmp.ge.s32.totalorder %v781, 1
      %vm802 = vcmp.ge.s32.totalorder %v782, 1
      %vm803 = vcmp.ge.s32.totalorder %v783, 1
      %vm804 = vcmp.ge.s32.totalorder %v784, 1
      %vm805 = vcmp.ge.s32.totalorder %v785, 1
      %vm806 = vcmp.ge.s32.totalorder %v786, 1
      %vm807 = vcmp.ge.s32.totalorder %v787, 1
      %vm808 = vcmp.ge.s32.totalorder %v788, 1
      %vm809 = vcmp.ge.s32.totalorder %v789, 1
      %vm810 = vcmp.ge.s32.totalorder %v790, 1
      %vm811 = vcmp.ge.s32.totalorder %v791, 1
      %vm812 = vcmp.ge.s32.totalorder %v792, 1
      %vm813 = vcmp.ge.s32.totalorder %v793, 1
      %vm814 = vcmp.ge.s32.totalorder %v794, 1
      %vm815 = vcmp.ge.s32.totalorder %v795, 1
      %vm816 = vcmp.ge.s32.totalorder %v796, 1
      %vm817 = vcmp.ge.s32.totalorder %v797, 1
      %v818 = vsel %vm798, 1, 0
      %v819 = vsel %vm799, 1, 0
      %v820 = vsel %vm800, 1, 0
      %v821 = vsel %vm801, 1, 0
      %v822 = vsel %vm802, 1, 0
      %v823 = vsel %vm803, 1, 0
      %v824 = vsel %vm804, 1, 0
      %v825 = vsel %vm805, 1, 0
      %v826 = vsel %vm806, 1, 0
      %v827 = vsel %vm807, 1, 0
      %v828 = vsel %vm808, 1, 0
      %v829 = vsel %vm809, 1, 0
      %v830 = vsel %vm810, 1, 0
      %v831 = vsel %vm811, 1, 0
      %v832 = vsel %vm812, 1, 0
      %v833 = vsel %vm813, 1, 0
      %v834 = vsel %vm814, 1, 0
      %v835 = vsel %vm815, 1, 0
      %v836 = vsel %vm816, 1, 0
      %v837 = vsel %vm817, 1, 0
      %vm838 = vcmp.eq.s32.totalorder %v818, 1
      %vm839 = vcmp.eq.s32.totalorder %v819, 1
      %vm840 = vcmp.eq.s32.totalorder %v820, 1
      %vm841 = vcmp.eq.s32.totalorder %v821, 1
      %vm842 = vcmp.eq.s32.totalorder %v822, 1
      %vm843 = vcmp.eq.s32.totalorder %v823, 1
      %vm844 = vcmp.eq.s32.totalorder %v824, 1
      %vm845 = vcmp.eq.s32.totalorder %v825, 1
      %vm846 = vcmp.eq.s32.totalorder %v826, 1
      %vm847 = vcmp.eq.s32.totalorder %v827, 1
      %vm848 = vcmp.eq.s32.totalorder %v828, 1
      %vm849 = vcmp.eq.s32.totalorder %v829, 1
      %vm850 = vcmp.eq.s32.totalorder %v830, 1
      %vm851 = vcmp.eq.s32.totalorder %v831, 1
      %vm852 = vcmp.eq.s32.totalorder %v832, 1
      %vm853 = vcmp.eq.s32.totalorder %v833, 1
      %vm854 = vcmp.eq.s32.totalorder %v834, 1
      %vm855 = vcmp.eq.s32.totalorder %v835, 1
      %vm856 = vcmp.eq.s32.totalorder %v836, 1
      %vm857 = vcmp.eq.s32.totalorder %v837, 1
      %v858 = vsel %vm838, %v533, 0.0
      %v859 = vsel %vm839, %v457, 0.0
      %v860 = vsel %vm840, %v534, 0.0
      %v861 = vsel %vm841, %v479, 0.0
      %v862 = vsel %vm842, %v481, 0.0
      %v863 = vsel %vm843, %v483, 0.0
      %v864 = vsel %vm844, %v485, 0.0
      %v865 = vsel %vm845, %v487, 0.0
      %v866 = vsel %vm846, %v489, 0.0
      %v867 = vsel %vm847, %v491, 0.0
      %v868 = vsel %vm848, %v493, 0.0
      %v869 = vsel %vm849, %v495, 0.0
      %v870 = vsel %vm850, %v497, 0.0
      %v871 = vsel %vm851, %v499, 0.0
      %v872 = vsel %vm852, %v501, 0.0
      %v873 = vsel %vm853, %v503, 0.0
      %v874 = vsel %vm854, %v505, 0.0
      %v875 = vsel %vm855, %v507, 0.0
      %v876 = vsel %vm856, %v535, 0.0
      %v877 = vsel %vm857, %v529, 0.0
      %vm878 = vcmp.le.s32.totalorder %v778, 14
      %vm879 = vcmp.le.s32.totalorder %v779, 14
      %vm880 = vcmp.le.s32.totalorder %v780, 14
      %vm881 = vcmp.le.s32.totalorder %v781, 14
      %vm882 = vcmp.le.s32.totalorder %v782, 14
      %vm883 = vcmp.le.s32.totalorder %v783, 14
      %vm884 = vcmp.le.s32.totalorder %v784, 14
      %vm885 = vcmp.le.s32.totalorder %v785, 14
      %vm886 = vcmp.le.s32.totalorder %v786, 14
      %vm887 = vcmp.le.s32.totalorder %v787, 14
      %vm888 = vcmp.le.s32.totalorder %v788, 14
      %vm889 = vcmp.le.s32.totalorder %v789, 14
      %vm890 = vcmp.le.s32.totalorder %v790, 14
      %vm891 = vcmp.le.s32.totalorder %v791, 14
      %vm892 = vcmp.le.s32.totalorder %v792, 14
      %vm893 = vcmp.le.s32.totalorder %v793, 14
      %vm894 = vcmp.le.s32.totalorder %v794, 14
      %vm895 = vcmp.le.s32.totalorder %v795, 14
      %vm896 = vcmp.le.s32.totalorder %v796, 14
      %vm897 = vcmp.le.s32.totalorder %v797, 14
      %v898 = vsel %vm878, 1, 0
      %v899 = vsel %vm879, 1, 0
      %v900 = vsel %vm880, 1, 0
      %v901 = vsel %vm881, 1, 0
      %v902 = vsel %vm882, 1, 0
      %v903 = vsel %vm883, 1, 0
      %v904 = vsel %vm884, 1, 0
      %v905 = vsel %vm885, 1, 0
      %v906 = vsel %vm886, 1, 0
      %v907 = vsel %vm887, 1, 0
      %v908 = vsel %vm888, 1, 0
      %v909 = vsel %vm889, 1, 0
      %v910 = vsel %vm890, 1, 0
      %v911 = vsel %vm891, 1, 0
      %v912 = vsel %vm892, 1, 0
      %v913 = vsel %vm893, 1, 0
      %v914 = vsel %vm894, 1, 0
      %v915 = vsel %vm895, 1, 0
      %v916 = vsel %vm896, 1, 0
      %v917 = vsel %vm897, 1, 0
      %vm918 = vcmp.eq.s32.totalorder %v898, 1
      %vm919 = vcmp.eq.s32.totalorder %v899, 1
      %vm920 = vcmp.eq.s32.totalorder %v900, 1
      %vm921 = vcmp.eq.s32.totalorder %v901, 1
      %vm922 = vcmp.eq.s32.totalorder %v902, 1
      %vm923 = vcmp.eq.s32.totalorder %v903, 1
      %vm924 = vcmp.eq.s32.totalorder %v904, 1
      %vm925 = vcmp.eq.s32.totalorder %v905, 1
      %vm926 = vcmp.eq.s32.totalorder %v906, 1
      %vm927 = vcmp.eq.s32.totalorder %v907, 1
      %vm928 = vcmp.eq.s32.totalorder %v908, 1
      %vm929 = vcmp.eq.s32.totalorder %v909, 1
      %vm930 = vcmp.eq.s32.totalorder %v910, 1
      %vm931 = vcmp.eq.s32.totalorder %v911, 1
      %vm932 = vcmp.eq.s32.totalorder %v912, 1
      %vm933 = vcmp.eq.s32.totalorder %v913, 1
      %vm934 = vcmp.eq.s32.totalorder %v914, 1
      %vm935 = vcmp.eq.s32.totalorder %v915, 1
      %vm936 = vcmp.eq.s32.totalorder %v916, 1
      %vm937 = vcmp.eq.s32.totalorder %v917, 1
      %vm942 = vcmask 1045504
      %v943 = vrot.slane %v533, 2
      %v944 = vrot.slane %v457, 2
      %v945 = vsel %vm942, %v943, %v944
      %v946 = vrot.slane %v534, 2
      %v947 = vsel %vm942, %v944, %v946
      %v948 = vrot.slane %v479, 2
      %v949 = vsel %vm942, %v946, %v948
      %v950 = vrot.slane %v481, 2
      %v951 = vsel %vm942, %v948, %v950
      %v952 = vrot.slane %v483, 2
      %v953 = vsel %vm942, %v950, %v952
      %v954 = vrot.slane %v485, 2
      %v955 = vsel %vm942, %v952, %v954
      %v956 = vrot.slane %v487, 2
      %v957 = vsel %vm942, %v954, %v956
      %v958 = vrot.slane %v489, 2
      %v959 = vsel %vm942, %v956, %v958
      %v960 = vrot.slane %v491, 2
      %v961 = vsel %vm942, %v958, %v960
      %v962 = vrot.slane %v493, 2
      %v963 = vsel %vm942, %v960, %v962
      %v964 = vrot.slane %v495, 2
      %v965 = vsel %vm942, %v962, %v964
      %v966 = vrot.slane %v497, 2
      %v967 = vsel %vm942, %v964, %v966
      %v968 = vrot.slane %v499, 2
      %v969 = vsel %vm942, %v966, %v968
      %v970 = vrot.slane %v501, 2
      %v971 = vsel %vm942, %v968, %v970
      %v972 = vrot.slane %v503, 2
      %v973 = vsel %vm942, %v970, %v972
      %v974 = vrot.slane %v505, 2
      %v975 = vsel %vm942, %v972, %v974
      %v976 = vrot.slane %v507, 2
      %v977 = vsel %vm942, %v974, %v976
      %v978 = vrot.slane %v535, 2
      %v979 = vsel %vm942, %v976, %v978
      %v980 = vrot.slane %v529, 2
      %v981 = vsel %vm942, %v978, %v980
      %v982 = vrot.slane %v536, 2
      %v983 = vsel %vm942, %v980, %v982
      %v1004 = vsel %vm918, %v945, 0.0
      %v1005 = vsel %vm919, %v947, 0.0
      %v1006 = vsel %vm920, %v949, 0.0
      %v1007 = vsel %vm921, %v951, 0.0
      %v1008 = vsel %vm922, %v953, 0.0
      %v1009 = vsel %vm923, %v955, 0.0
      %v1010 = vsel %vm924, %v957, 0.0
      %v1011 = vsel %vm925, %v959, 0.0
      %v1012 = vsel %vm926, %v961, 0.0
      %v1013 = vsel %vm927, %v963, 0.0
      %v1014 = vsel %vm928, %v965, 0.0
      %v1015 = vsel %vm929, %v967, 0.0
      %v1016 = vsel %vm930, %v969, 0.0
      %v1017 = vsel %vm931, %v971, 0.0
      %v1018 = vsel %vm932, %v973, 0.0
      %v1019 = vsel %vm933, %v975, 0.0
      %v1020 = vsel %vm934, %v977, 0.0
      %v1021 = vsel %vm935, %v979, 0.0
      %v1022 = vsel %vm936, %v981, 0.0
      %v1023 = vsel %vm937, %v983, 0.0
      %v1024 = vld [vmem:[%s3] sm:$0x7]
      %v1025 = vld [vmem:[%s3 + $0x4] sm:$0x7]
      %v1026 = vld [vmem:[%s3 + $0x8] sm:$0x7]
      %v1027 = vlaneseq
      %v1028 = vshrl.u32 %v1027, 7
      %v1029 = vsub.s32 0, %v1028
      %v1030 = vrot.slane %v1024, %v1029
      %v1031 = vmul.f32 %v858, %v1030
      %v1032 = vmul.f32 %v859, %v1030
      %v1033 = vmul.f32 %v860, %v1030
      %v1034 = vmul.f32 %v861, %v1030
      %v1035 = vmul.f32 %v862, %v1030
      %v1036 = vmul.f32 %v863, %v1030
      %v1037 = vmul.f32 %v864, %v1030
      %v1038 = vmul.f32 %v865, %v1030
      %v1039 = vmul.f32 %v866, %v1030
      %v1040 = vmul.f32 %v867, %v1030
      %v1041 = vmul.f32 %v868, %v1030
      %v1042 = vmul.f32 %v869, %v1030
      %v1043 = vmul.f32 %v870, %v1030
      %v1044 = vmul.f32 %v871, %v1030
      %v1045 = vmul.f32 %v872, %v1030
      %v1046 = vmul.f32 %v873, %v1030
      %v1047 = vadd.f32 %v1031, 0.0
      %v1048 = vadd.f32 %v1032, 0.0
      %v1049 = vadd.f32 %v1033, 0.0
      %v1050 = vadd.f32 %v1034, 0.0
      %v1051 = vadd.f32 %v1035, 0.0
      %v1052 = vadd.f32 %v1036, 0.0
      %v1053 = vadd.f32 %v1037, 0.0
      %v1054 = vadd.f32 %v1038, 0.0
      %v1055 = vadd.f32 %v1039, 0.0
      %v1056 = vadd.f32 %v1040, 0.0
      %v1057 = vadd.f32 %v1041, 0.0
      %v1058 = vadd.f32 %v1042, 0.0
      %v1059 = vadd.f32 %v1043, 0.0
      %v1060 = vadd.f32 %v1044, 0.0
      %v1061 = vadd.f32 %v1045, 0.0
      %v1062 = vadd.f32 %v1046, 0.0
      %v1063 = vlaneseq
      %v1064 = vshrl.u32 %v1063, 7
      %v1065 = vsub.s32 0, %v1064
      %v1066 = vrot.slane %v1025, %v1065
      %v1067 = vmul.f32 %v860, %v1066
      %v1068 = vmul.f32 %v861, %v1066
      %v1069 = vmul.f32 %v862, %v1066
      %v1070 = vmul.f32 %v863, %v1066
      %v1071 = vmul.f32 %v864, %v1066
      %v1072 = vmul.f32 %v865, %v1066
      %v1073 = vmul.f32 %v866, %v1066
      %v1074 = vmul.f32 %v867, %v1066
      %v1075 = vmul.f32 %v868, %v1066
      %v1076 = vmul.f32 %v869, %v1066
      %v1077 = vmul.f32 %v870, %v1066
      %v1078 = vmul.f32 %v871, %v1066
      %v1079 = vmul.f32 %v872, %v1066
      %v1080 = vmul.f32 %v873, %v1066
      %v1081 = vmul.f32 %v874, %v1066
      %v1082 = vmul.f32 %v875, %v1066
      %v1083 = vadd.f32 %v1047, %v1067
      %v1084 = vadd.f32 %v1048, %v1068
      %v1085 = vadd.f32 %v1049, %v1069
      %v1086 = vadd.f32 %v1050, %v1070
      %v1087 = vadd.f32 %v1051, %v1071
      %v1088 = vadd.f32 %v1052, %v1072
      %v1089 = vadd.f32 %v1053, %v1073
      %v1090 = vadd.f32 %v1054, %v1074
      %v1091 = vadd.f32 %v1055, %v1075
      %v1092 = vadd.f32 %v1056, %v1076
      %v1093 = vadd.f32 %v1057, %v1077
      %v1094 = vadd.f32 %v1058, %v1078
      %v1095 = vadd.f32 %v1059, %v1079
      %v1096 = vadd.f32 %v1060, %v1080
      %v1097 = vadd.f32 %v1061, %v1081
      %v1098 = vadd.f32 %v1062, %v1082
      %v1099 = vlaneseq
      %v1100 = vshrl.u32 %v1099, 7
      %v1101 = vsub.s32 0, %v1100
      %v1102 = vrot.slane %v1026, %v1101
      %v1103 = vmul.f32 %v862, %v1102
      %v1104 = vmul.f32 %v863, %v1102
      %v1105 = vmul.f32 %v864, %v1102
      %v1106 = vmul.f32 %v865, %v1102
      %v1107 = vmul.f32 %v866, %v1102
      %v1108 = vmul.f32 %v867, %v1102
      %v1109 = vmul.f32 %v868, %v1102
      %v1110 = vmul.f32 %v869, %v1102
      %v1111 = vmul.f32 %v870, %v1102
      %v1112 = vmul.f32 %v871, %v1102
      %v1113 = vmul.f32 %v872, %v1102
      %v1114 = vmul.f32 %v873, %v1102
      %v1115 = vmul.f32 %v874, %v1102
      %v1116 = vmul.f32 %v875, %v1102
      %v1117 = vmul.f32 %v876, %v1102
      %v1118 = vmul.f32 %v877, %v1102
      %v1119 = vadd.f32 %v1083, %v1103
      %v1120 = vadd.f32 %v1084, %v1104
      %v1121 = vadd.f32 %v1085, %v1105
      %v1122 = vadd.f32 %v1086, %v1106
      %v1123 = vadd.f32 %v1087, %v1107
      %v1124 = vadd.f32 %v1088, %v1108
      %v1125 = vadd.f32 %v1089, %v1109
      %v1126 = vadd.f32 %v1090, %v1110
      %v1127 = vadd.f32 %v1091, %v1111
      %v1128 = vadd.f32 %v1092, %v1112
      %v1129 = vadd.f32 %v1093, %v1113
      %v1130 = vadd.f32 %v1094, %v1114
      %v1131 = vadd.f32 %v1095, %v1115
      %v1132 = vadd.f32 %v1096, %v1116
      %v1133 = vadd.f32 %v1097, %v1117
      %v1134 = vadd.f32 %v1098, %v1118
      %v1135 = vlaneseq
      %v1136 = vshrl.u32 %v1135, 7
      %v1137 = vsub.s32 1, %v1136
      %v1138 = vrot.slane %v1024, %v1137
      %v1139 = vmul.f32 %v533, %v1138
      %v1140 = vmul.f32 %v457, %v1138
      %v1141 = vmul.f32 %v534, %v1138
      %v1142 = vmul.f32 %v479, %v1138
      %v1143 = vmul.f32 %v481, %v1138
      %v1144 = vmul.f32 %v483, %v1138
      %v1145 = vmul.f32 %v485, %v1138
      %v1146 = vmul.f32 %v487, %v1138
      %v1147 = vmul.f32 %v489, %v1138
      %v1148 = vmul.f32 %v491, %v1138
      %v1149 = vmul.f32 %v493, %v1138
      %v1150 = vmul.f32 %v495, %v1138
      %v1151 = vmul.f32 %v497, %v1138
      %v1152 = vmul.f32 %v499, %v1138
      %v1153 = vmul.f32 %v501, %v1138
      %v1154 = vmul.f32 %v503, %v1138
      %v1155 = vmul.f32 %v505, %v1138
      %vm1173 = vcmask 1046528
      %v1174 = vrot.slane %v1139, 1
      %v1175 = vrot.slane %v1140, 1
      %v1176 = vsel %vm1173, %v1174, %v1175
      %v1177 = vrot.slane %v1141, 1
      %v1178 = vsel %vm1173, %v1175, %v1177
      %v1179 = vrot.slane %v1142, 1
      %v1180 = vsel %vm1173, %v1177, %v1179
      %v1181 = vrot.slane %v1143, 1
      %v1182 = vsel %vm1173, %v1179, %v1181
      %v1183 = vrot.slane %v1144, 1
      %v1184 = vsel %vm1173, %v1181, %v1183
      %v1185 = vrot.slane %v1145, 1
      %v1186 = vsel %vm1173, %v1183, %v1185
      %v1187 = vrot.slane %v1146, 1
      %v1188 = vsel %vm1173, %v1185, %v1187
      %v1189 = vrot.slane %v1147, 1
      %v1190 = vsel %vm1173, %v1187, %v1189
      %v1191 = vrot.slane %v1148, 1
      %v1192 = vsel %vm1173, %v1189, %v1191
      %v1193 = vrot.slane %v1149, 1
      %v1194 = vsel %vm1173, %v1191, %v1193
      %v1195 = vrot.slane %v1150, 1
      %v1196 = vsel %vm1173, %v1193, %v1195
      %v1197 = vrot.slane %v1151, 1
      %v1198 = vsel %vm1173, %v1195, %v1197
      %v1199 = vrot.slane %v1152, 1
      %v1200 = vsel %vm1173, %v1197, %v1199
      %v1201 = vrot.slane %v1153, 1
      %v1202 = vsel %vm1173, %v1199, %v1201
      %v1203 = vrot.slane %v1154, 1
      %v1204 = vsel %vm1173, %v1201, %v1203
      %v1205 = vrot.slane %v1155, 1
      %v1206 = vsel %vm1173, %v1203, %v1205
      %v1223 = vadd.f32 %v1119, %v1176
      %v1224 = vadd.f32 %v1120, %v1178
      %v1225 = vadd.f32 %v1121, %v1180
      %v1226 = vadd.f32 %v1122, %v1182
      %v1227 = vadd.f32 %v1123, %v1184
      %v1228 = vadd.f32 %v1124, %v1186
      %v1229 = vadd.f32 %v1125, %v1188
      %v1230 = vadd.f32 %v1126, %v1190
      %v1231 = vadd.f32 %v1127, %v1192
      %v1232 = vadd.f32 %v1128, %v1194
      %v1233 = vadd.f32 %v1129, %v1196
      %v1234 = vadd.f32 %v1130, %v1198
      %v1235 = vadd.f32 %v1131, %v1200
      %v1236 = vadd.f32 %v1132, %v1202
      %v1237 = vadd.f32 %v1133, %v1204
      %v1238 = vadd.f32 %v1134, %v1206
      %v1239 = vlaneseq
      %v1240 = vshrl.u32 %v1239, 7
      %v1241 = vsub.s32 1, %v1240
      %v1242 = vrot.slane %v1025, %v1241
      %v1243 = vmul.f32 %v534, %v1242
      %v1244 = vmul.f32 %v479, %v1242
      %v1245 = vmul.f32 %v481, %v1242
      %v1246 = vmul.f32 %v483, %v1242
      %v1247 = vmul.f32 %v485, %v1242
      %v1248 = vmul.f32 %v487, %v1242
      %v1249 = vmul.f32 %v489, %v1242
      %v1250 = vmul.f32 %v491, %v1242
      %v1251 = vmul.f32 %v493, %v1242
      %v1252 = vmul.f32 %v495, %v1242
      %v1253 = vmul.f32 %v497, %v1242
      %v1254 = vmul.f32 %v499, %v1242
      %v1255 = vmul.f32 %v501, %v1242
      %v1256 = vmul.f32 %v503, %v1242
      %v1257 = vmul.f32 %v505, %v1242
      %v1258 = vmul.f32 %v507, %v1242
      %v1259 = vmul.f32 %v535, %v1242
      %v1277 = vrot.slane %v1243, 1
      %v1278 = vrot.slane %v1244, 1
      %v1279 = vsel %vm1173, %v1277, %v1278
      %v1280 = vrot.slane %v1245, 1
      %v1281 = vsel %vm1173, %v1278, %v1280
      %v1282 = vrot.slane %v1246, 1
      %v1283 = vsel %vm1173, %v1280, %v1282
      %v1284 = vrot.slane %v1247, 1
      %v1285 = vsel %vm1173, %v1282, %v1284
      %v1286 = vrot.slane %v1248, 1
      %v1287 = vsel %vm1173, %v1284, %v1286
      %v1288 = vrot.slane %v1249, 1
      %v1289 = vsel %vm1173, %v1286, %v1288
      %v1290 = vrot.slane %v1250, 1
      %v1291 = vsel %vm1173, %v1288, %v1290
      %v1292 = vrot.slane %v1251, 1
      %v1293 = vsel %vm1173, %v1290, %v1292
      %v1294 = vrot.slane %v1252, 1
      %v1295 = vsel %vm1173, %v1292, %v1294
      %v1296 = vrot.slane %v1253, 1
      %v1297 = vsel %vm1173, %v1294, %v1296
      %v1298 = vrot.slane %v1254, 1
      %v1299 = vsel %vm1173, %v1296, %v1298
      %v1300 = vrot.slane %v1255, 1
      %v1301 = vsel %vm1173, %v1298, %v1300
      %v1302 = vrot.slane %v1256, 1
      %v1303 = vsel %vm1173, %v1300, %v1302
      %v1304 = vrot.slane %v1257, 1
      %v1305 = vsel %vm1173, %v1302, %v1304
      %v1306 = vrot.slane %v1258, 1
      %v1307 = vsel %vm1173, %v1304, %v1306
      %v1308 = vrot.slane %v1259, 1
      %v1309 = vsel %vm1173, %v1306, %v1308
      %v1326 = vadd.f32 %v1223, %v1279
      %v1327 = vadd.f32 %v1224, %v1281
      %v1328 = vadd.f32 %v1225, %v1283
      %v1329 = vadd.f32 %v1226, %v1285
      %v1330 = vadd.f32 %v1227, %v1287
      %v1331 = vadd.f32 %v1228, %v1289
      %v1332 = vadd.f32 %v1229, %v1291
      %v1333 = vadd.f32 %v1230, %v1293
      %v1334 = vadd.f32 %v1231, %v1295
      %v1335 = vadd.f32 %v1232, %v1297
      %v1336 = vadd.f32 %v1233, %v1299
      %v1337 = vadd.f32 %v1234, %v1301
      %v1338 = vadd.f32 %v1235, %v1303
      %v1339 = vadd.f32 %v1236, %v1305
      %v1340 = vadd.f32 %v1237, %v1307
      %v1341 = vadd.f32 %v1238, %v1309
      %v1342 = vlaneseq
      %v1343 = vshrl.u32 %v1342, 7
      %v1344 = vsub.s32 1, %v1343
      %v1345 = vrot.slane %v1026, %v1344
      %v1346 = vmul.f32 %v481, %v1345
      %v1347 = vmul.f32 %v483, %v1345
      %v1348 = vmul.f32 %v485, %v1345
      %v1349 = vmul.f32 %v487, %v1345
      %v1350 = vmul.f32 %v489, %v1345
      %v1351 = vmul.f32 %v491, %v1345
      %v1352 = vmul.f32 %v493, %v1345
      %v1353 = vmul.f32 %v495, %v1345
      %v1354 = vmul.f32 %v497, %v1345
      %v1355 = vmul.f32 %v499, %v1345
      %v1356 = vmul.f32 %v501, %v1345
      %v1357 = vmul.f32 %v503, %v1345
      %v1358 = vmul.f32 %v505, %v1345
      %v1359 = vmul.f32 %v507, %v1345
      %v1360 = vmul.f32 %v535, %v1345
      %v1361 = vmul.f32 %v529, %v1345
      %v1362 = vmul.f32 %v536, %v1345
      %v1380 = vrot.slane %v1346, 1
      %v1381 = vrot.slane %v1347, 1
      %v1382 = vsel %vm1173, %v1380, %v1381
      %v1383 = vrot.slane %v1348, 1
      %v1384 = vsel %vm1173, %v1381, %v1383
      %v1385 = vrot.slane %v1349, 1
      %v1386 = vsel %vm1173, %v1383, %v1385
      %v1387 = vrot.slane %v1350, 1
      %v1388 = vsel %vm1173, %v1385, %v1387
      %v1389 = vrot.slane %v1351, 1
      %v1390 = vsel %vm1173, %v1387, %v1389
      %v1391 = vrot.slane %v1352, 1
      %v1392 = vsel %vm1173, %v1389, %v1391
      %v1393 = vrot.slane %v1353, 1
      %v1394 = vsel %vm1173, %v1391, %v1393
      %v1395 = vrot.slane %v1354, 1
      %v1396 = vsel %vm1173, %v1393, %v1395
      %v1397 = vrot.slane %v1355, 1
      %v1398 = vsel %vm1173, %v1395, %v1397
      %v1399 = vrot.slane %v1356, 1
      %v1400 = vsel %vm1173, %v1397, %v1399
      %v1401 = vrot.slane %v1357, 1
      %v1402 = vsel %vm1173, %v1399, %v1401
      %v1403 = vrot.slane %v1358, 1
      %v1404 = vsel %vm1173, %v1401, %v1403
      %v1405 = vrot.slane %v1359, 1
      %v1406 = vsel %vm1173, %v1403, %v1405
      %v1407 = vrot.slane %v1360, 1
      %v1408 = vsel %vm1173, %v1405, %v1407
      %v1409 = vrot.slane %v1361, 1
      %v1410 = vsel %vm1173, %v1407, %v1409
      %v1411 = vrot.slane %v1362, 1
      %v1412 = vsel %vm1173, %v1409, %v1411
      %v1429 = vadd.f32 %v1326, %v1382
      %v1430 = vadd.f32 %v1327, %v1384
      %v1431 = vadd.f32 %v1328, %v1386
      %v1432 = vadd.f32 %v1329, %v1388
      %v1433 = vadd.f32 %v1330, %v1390
      %v1434 = vadd.f32 %v1331, %v1392
      %v1435 = vadd.f32 %v1332, %v1394
      %v1436 = vadd.f32 %v1333, %v1396
      %v1437 = vadd.f32 %v1334, %v1398
      %v1438 = vadd.f32 %v1335, %v1400
      %v1439 = vadd.f32 %v1336, %v1402
      %v1440 = vadd.f32 %v1337, %v1404
      %v1441 = vadd.f32 %v1338, %v1406
      %v1442 = vadd.f32 %v1339, %v1408
      %v1443 = vadd.f32 %v1340, %v1410
      %v1444 = vadd.f32 %v1341, %v1412
      %v1445 = vlaneseq
      %v1446 = vshrl.u32 %v1445, 7
      %v1447 = vsub.s32 2, %v1446
      %v1448 = vrot.slane %v1024, %v1447
      %v1449 = vmul.f32 %v1004, %v1448
      %v1450 = vmul.f32 %v1005, %v1448
      %v1451 = vmul.f32 %v1006, %v1448
      %v1452 = vmul.f32 %v1007, %v1448
      %v1453 = vmul.f32 %v1008, %v1448
      %v1454 = vmul.f32 %v1009, %v1448
      %v1455 = vmul.f32 %v1010, %v1448
      %v1456 = vmul.f32 %v1011, %v1448
      %v1457 = vmul.f32 %v1012, %v1448
      %v1458 = vmul.f32 %v1013, %v1448
      %v1459 = vmul.f32 %v1014, %v1448
      %v1460 = vmul.f32 %v1015, %v1448
      %v1461 = vmul.f32 %v1016, %v1448
      %v1462 = vmul.f32 %v1017, %v1448
      %v1463 = vmul.f32 %v1018, %v1448
      %v1464 = vmul.f32 %v1019, %v1448
      %v1465 = vadd.f32 %v1429, %v1449
      %v1466 = vadd.f32 %v1430, %v1450
      %v1467 = vadd.f32 %v1431, %v1451
      %v1468 = vadd.f32 %v1432, %v1452
      %v1469 = vadd.f32 %v1433, %v1453
      %v1470 = vadd.f32 %v1434, %v1454
      %v1471 = vadd.f32 %v1435, %v1455
      %v1472 = vadd.f32 %v1436, %v1456
      %v1473 = vadd.f32 %v1437, %v1457
      %v1474 = vadd.f32 %v1438, %v1458
      %v1475 = vadd.f32 %v1439, %v1459
      %v1476 = vadd.f32 %v1440, %v1460
      %v1477 = vadd.f32 %v1441, %v1461
      %v1478 = vadd.f32 %v1442, %v1462
      %v1479 = vadd.f32 %v1443, %v1463
      %v1480 = vadd.f32 %v1444, %v1464
      %v1481 = vlaneseq
      %v1482 = vshrl.u32 %v1481, 7
      %v1483 = vsub.s32 2, %v1482
      %v1484 = vrot.slane %v1025, %v1483
      %v1485 = vmul.f32 %v1006, %v1484
      %v1486 = vmul.f32 %v1007, %v1484
      %v1487 = vmul.f32 %v1008, %v1484
      %v1488 = vmul.f32 %v1009, %v1484
      %v1489 = vmul.f32 %v1010, %v1484
      %v1490 = vmul.f32 %v1011, %v1484
      %v1491 = vmul.f32 %v1012, %v1484
      %v1492 = vmul.f32 %v1013, %v1484
      %v1493 = vmul.f32 %v1014, %v1484
      %v1494 = vmul.f32 %v1015, %v1484
      %v1495 = vmul.f32 %v1016, %v1484
      %v1496 = vmul.f32 %v1017, %v1484
      %v1497 = vmul.f32 %v1018, %v1484
      %v1498 = vmul.f32 %v1019, %v1484
      %v1499 = vmul.f32 %v1020, %v1484
      %v1500 = vmul.f32 %v1021, %v1484
      %v1501 = vadd.f32 %v1465, %v1485
      %v1502 = vadd.f32 %v1466, %v1486
      %v1503 = vadd.f32 %v1467, %v1487
      %v1504 = vadd.f32 %v1468, %v1488
      %v1505 = vadd.f32 %v1469, %v1489
      %v1506 = vadd.f32 %v1470, %v1490
      %v1507 = vadd.f32 %v1471, %v1491
      %v1508 = vadd.f32 %v1472, %v1492
      %v1509 = vadd.f32 %v1473, %v1493
      %v1510 = vadd.f32 %v1474, %v1494
      %v1511 = vadd.f32 %v1475, %v1495
      %v1512 = vadd.f32 %v1476, %v1496
      %v1513 = vadd.f32 %v1477, %v1497
      %v1514 = vadd.f32 %v1478, %v1498
      %v1515 = vadd.f32 %v1479, %v1499
      %v1516 = vadd.f32 %v1480, %v1500
      %v1517 = vlaneseq
      %v1518 = vshrl.u32 %v1517, 7
      %v1519 = vsub.s32 2, %v1518
      %v1520 = vrot.slane %v1026, %v1519
      %v1521 = vmul.f32 %v1008, %v1520
      %v1522 = vmul.f32 %v1009, %v1520
      %v1523 = vmul.f32 %v1010, %v1520
      %v1524 = vmul.f32 %v1011, %v1520
      %v1525 = vmul.f32 %v1012, %v1520
      %v1526 = vmul.f32 %v1013, %v1520
      %v1527 = vmul.f32 %v1014, %v1520
      %v1528 = vmul.f32 %v1015, %v1520
      %v1529 = vmul.f32 %v1016, %v1520
      %v1530 = vmul.f32 %v1017, %v1520
      %v1531 = vmul.f32 %v1018, %v1520
      %v1532 = vmul.f32 %v1019, %v1520
      %v1533 = vmul.f32 %v1020, %v1520
      %v1534 = vmul.f32 %v1021, %v1520
      %v1535 = vmul.f32 %v1022, %v1520
      %v1536 = vmul.f32 %v1023, %v1520
      %v1537 = vadd.f32 %v1501, %v1521
      %v1538 = vadd.f32 %v1502, %v1522
      %v1539 = vadd.f32 %v1503, %v1523
      %v1540 = vadd.f32 %v1504, %v1524
      %v1541 = vadd.f32 %v1505, %v1525
      %v1542 = vadd.f32 %v1506, %v1526
      %v1543 = vadd.f32 %v1507, %v1527
      %v1544 = vadd.f32 %v1508, %v1528
      %v1545 = vadd.f32 %v1509, %v1529
      %v1546 = vadd.f32 %v1510, %v1530
      %v1547 = vadd.f32 %v1511, %v1531
      %v1548 = vadd.f32 %v1512, %v1532
      %v1549 = vadd.f32 %v1513, %v1533
      %v1550 = vadd.f32 %v1514, %v1534
      %v1551 = vadd.f32 %v1515, %v1535
      %v1552 = vadd.f32 %v1516, %v1536
      %v1553 = vld [vmem:[%s4] sm:$0xf]
      %v1554 = vld [vmem:[%s5] sm:$0x1]
      %v1556 = vlaneseq
      %v1557 = vshrl.u32 %v1556, 7
      %v1558 = vsub.s32 0, %v1557
      %v1559 = vrot.slane %v1554, %v1558
      %vm1561 = vcmask 31744
      %v1563 = vsel %vm1561, %v1537, 0
      %v1566 = vsel %vm1561, %v1538, 0
      %v1569 = vsel %vm1561, %v1539, 0
      %v1572 = vsel %vm1561, %v1540, 0
      %v1575 = vsel %vm1561, %v1541, 0
      %v1578 = vsel %vm1561, %v1542, 0
      %v1581 = vsel %vm1561, %v1543, 0
      %v1584 = vsel %vm1561, %v1544, 0
      %v1587 = vsel %vm1561, %v1545, 0
      %v1590 = vsel %vm1561, %v1546, 0
      %v1593 = vsel %vm1561, %v1547, 0
      %v1596 = vsel %vm1561, %v1548, 0
      %v1599 = vsel %vm1561, %v1549, 0
      %v1602 = vsel %vm1561, %v1550, 0
      %v1605 = vsel %vm1561, %v1551, 0
      %v1608 = vsel %vm1561, %v1552, 0
      %vm1610 = vcmask 1043456
      %v1612 = vsel %vm1610, %v1553, 0
      %1614 = vmatprep.subr.mxu0 0.0
      %1615 = vmatpush1.msra.mxu0 0.0
      %1616 = vmatprep.subr.mxu0 0.0
      %1617 = vmatpush1.msra.mxu0 0.0
      %1618 = vmatprep.subr.mxu0 0.0
      %1619 = vmatpush1.msra.mxu0 0.0
      %1620 = vmatprep.subr.mxu0 0.0
      %1621 = vmatpush1.msra.mxu0 0.0
      %1622 = vmatprep.subr.mxu0 0.0
      %1623 = vmatpush1.msra.mxu0 0.0
      %1624 = vmatprep.subr.mxu0 0.0
      %1625 = vmatpush1.msra.mxu0 0.0
      %1626 = vmatprep.subr.mxu0 0.0
      %1627 = vmatpush1.msra.mxu0 0.0
      %1628 = vmatprep.subr.mxu0 0.0
      %1629 = vmatpush1.msra.mxu0 0.0
      %1630 = vmatprep.subr.mxu0 0.0
      %1631 = vmatpush1.msra.mxu0 0.0
      %1632 = vmatprep.subr.mxu0 0.0
      %1633 = vmatpush1.msra.mxu0 0.0
      %1634 = vmatprep.subr.mxu0 0.0
      %1635 = vmatpush1.msra.mxu0 0.0
      %1636 = vmatprep.subr.mxu0 0.0
      %1637 = vmatpush1.msra.mxu0 0.0
      %1638 = vmatprep.subr.mxu0 0.0
      %1639 = vmatpush1.msra.mxu0 0.0
      %1640 = vmatprep.subr.mxu0 0.0
      %1641 = vmatpush1.msra.mxu0 0.0
      %1642 = vmatprep.subr.mxu0 0.0
      %1643 = vmatpush1.msra.mxu0 0.0
      %1644 = vmatprep.subr.mxu0 0.0
      %1645 = vmatpush1.msra.mxu0 %v1612
      %1646 = vmatprep.subr.mxu0 0.0
      %1647 = vmatpush2.msra.mxu0 0.0
      %1648 = vmatprep.subr.mxu0 0.0
      %1649 = vmatpush2.msra.mxu0 0.0
      %1650 = vmatprep.subr.mxu0 0.0
      %1651 = vmatpush2.msra.mxu0 0.0
      %1652 = vmatprep.subr.mxu0 0.0
      %1653 = vmatpush2.msra.mxu0 0.0
      %1654 = vmatprep.subr.mxu0 0.0
      %1655 = vmatpush2.msra.mxu0 0.0
      %1656 = vmatprep.subr.mxu0 0.0
      %1657 = vmatpush2.msra.mxu0 0.0
      %1658 = vmatprep.subr.mxu0 0.0
      %1659 = vmatpush2.msra.mxu0 0.0
      %1660 = vmatprep.subr.mxu0 0.0
      %1661 = vmatpush2.msra.mxu0 0.0
      %1662 = vmatprep.subr.mxu0 0.0
      %1663 = vmatpush2.msra.mxu0 0.0
      %1664 = vmatprep.subr.mxu0 0.0
      %1665 = vmatpush2.msra.mxu0 0.0
      %1666 = vmatprep.subr.mxu0 0.0
      %1667 = vmatpush2.msra.mxu0 0.0
      %1668 = vmatprep.subr.mxu0 0.0
      %1669 = vmatpush2.msra.mxu0 0.0
      %1670 = vmatprep.subr.mxu0 0.0
      %1671 = vmatpush2.msra.mxu0 0.0
      %1672 = vmatprep.subr.mxu0 0.0
      %1673 = vmatpush2.msra.mxu0 0.0
      %1674 = vmatprep.subr.mxu0 0.0
      %1675 = vmatpush2.msra.mxu0 0.0
      %1676 = vmatprep.subr.mxu0 0.0
      %1677 = vmatpush2.msra.mxu0 0.0
      %1678 = vmatprep.mubr.f32.mxu0 0.0
      %1679 = vmatmul.mubr.f32.gmra.mxu0 %v1563
      %v1680 = vpop.f32.mrf.mxu0
      %v1681 = vadd.f32 %v1559, %v1680
      %v1682 = vpop.f32.mrf.mxu0
      %1683 = vmatprep.mubr.f32.mxu0 0.0
      %1684 = vmatmul.mubr.f32.gmra.mxu0 %v1566
      %v1685 = vpop.f32.mrf.mxu0
      %v1686 = vadd.f32 %v1559, %v1685
      %v1687 = vpop.f32.mrf.mxu0
      %1688 = vmatprep.mubr.f32.mxu0 0.0
      %1689 = vmatmul.mubr.f32.gmra.mxu0 %v1569
      %v1690 = vpop.f32.mrf.mxu0
      %v1691 = vadd.f32 %v1559, %v1690
      %v1692 = vpop.f32.mrf.mxu0
      %1693 = vmatprep.mubr.f32.mxu0 0.0
      %1694 = vmatmul.mubr.f32.gmra.mxu0 %v1572
      %v1695 = vpop.f32.mrf.mxu0
      %v1696 = vadd.f32 %v1559, %v1695
      %v1697 = vpop.f32.mrf.mxu0
      %1698 = vmatprep.mubr.f32.mxu0 0.0
      %1699 = vmatmul.mubr.f32.gmra.mxu0 %v1575
      %v1700 = vpop.f32.mrf.mxu0
      %v1701 = vadd.f32 %v1559, %v1700
      %v1702 = vpop.f32.mrf.mxu0
      %1703 = vmatprep.mubr.f32.mxu0 0.0
      %1704 = vmatmul.mubr.f32.gmra.mxu0 %v1578
      %v1705 = vpop.f32.mrf.mxu0
      %v1706 = vadd.f32 %v1559, %v1705
      %v1707 = vpop.f32.mrf.mxu0
      %1708 = vmatprep.mubr.f32.mxu0 0.0
      %1709 = vmatmul.mubr.f32.gmra.mxu0 %v1581
      %v1710 = vpop.f32.mrf.mxu0
      %v1711 = vadd.f32 %v1559, %v1710
      %v1712 = vpop.f32.mrf.mxu0
      %1713 = vmatprep.mubr.f32.mxu0 0.0
      %1714 = vmatmul.mubr.f32.gmra.mxu0 %v1584
      %v1715 = vpop.f32.mrf.mxu0
      %v1716 = vadd.f32 %v1559, %v1715
      %v1717 = vpop.f32.mrf.mxu0
      %1718 = vmatprep.mubr.f32.mxu0 0.0
      %1719 = vmatmul.mubr.f32.gmra.mxu0 %v1587
      %v1720 = vpop.f32.mrf.mxu0
      %v1721 = vadd.f32 %v1559, %v1720
      %v1722 = vpop.f32.mrf.mxu0
      %1723 = vmatprep.mubr.f32.mxu0 0.0
      %1724 = vmatmul.mubr.f32.gmra.mxu0 %v1590
      %v1725 = vpop.f32.mrf.mxu0
      %v1726 = vadd.f32 %v1559, %v1725
      %v1727 = vpop.f32.mrf.mxu0
      %1728 = vmatprep.mubr.f32.mxu0 0.0
      %1729 = vmatmul.mubr.f32.gmra.mxu0 %v1593
      %v1730 = vpop.f32.mrf.mxu0
      %v1731 = vadd.f32 %v1559, %v1730
      %v1732 = vpop.f32.mrf.mxu0
      %1733 = vmatprep.mubr.f32.mxu0 0.0
      %1734 = vmatmul.mubr.f32.gmra.mxu0 %v1596
      %v1735 = vpop.f32.mrf.mxu0
      %v1736 = vadd.f32 %v1559, %v1735
      %v1737 = vpop.f32.mrf.mxu0
      %1738 = vmatprep.mubr.f32.mxu0 0.0
      %1739 = vmatmul.mubr.f32.gmra.mxu0 %v1599
      %v1740 = vpop.f32.mrf.mxu0
      %v1741 = vadd.f32 %v1559, %v1740
      %v1742 = vpop.f32.mrf.mxu0
      %1743 = vmatprep.mubr.f32.mxu0 0.0
      %1744 = vmatmul.mubr.f32.gmra.mxu0 %v1602
      %v1745 = vpop.f32.mrf.mxu0
      %v1746 = vadd.f32 %v1559, %v1745
      %v1747 = vpop.f32.mrf.mxu0
      %1748 = vmatprep.mubr.f32.mxu0 0.0
      %1749 = vmatmul.mubr.f32.gmra.mxu0 %v1605
      %v1750 = vpop.f32.mrf.mxu0
      %v1751 = vadd.f32 %v1559, %v1750
      %v1752 = vpop.f32.mrf.mxu0
      %1753 = vmatprep.mubr.f32.mxu0 0.0
      %1754 = vmatmul.mubr.f32.gmra.mxu0 %v1608
      %v1755 = vpop.f32.mrf.mxu0
      %v1756 = vadd.f32 %v1559, %v1755
      %v1757 = vpop.f32.mrf.mxu0
      %1758 = vdwg.mxu0
      %vm1759 = vcmask 64512
      %1760 = vst.msk [vmem:[%s418] sm:$0xff] %vm1759, %v1681
      %1761 = vst.msk [vmem:[%s418 + $0x8] sm:$0xff] %vm1759, %v1686
      %1762 = vst.msk [vmem:[%s418 + $0x10] sm:$0xff] %vm1759, %v1691
      %1763 = vst.msk [vmem:[%s418 + $0x18] sm:$0xff] %vm1759, %v1696
      %1764 = vst.msk [vmem:[%s418 + $0x20] sm:$0xff] %vm1759, %v1701
      %1765 = vst.msk [vmem:[%s418 + $0x28] sm:$0xff] %vm1759, %v1706
      %1766 = vst.msk [vmem:[%s418 + $0x30] sm:$0xff] %vm1759, %v1711
      %1767 = vst.msk [vmem:[%s418 + $0x38] sm:$0xff] %vm1759, %v1716
      %1768 = vst.msk [vmem:[%s418 + $0x40] sm:$0xff] %vm1759, %v1721
      %1769 = vst.msk [vmem:[%s418 + $0x48] sm:$0xff] %vm1759, %v1726
      %1770 = vst.msk [vmem:[%s418 + $0x50] sm:$0xff] %vm1759, %v1731
      %1771 = vst.msk [vmem:[%s418 + $0x58] sm:$0xff] %vm1759, %v1736
      %1772 = vst.msk [vmem:[%s418 + $0x60] sm:$0xff] %vm1759, %v1741
      %1773 = vst.msk [vmem:[%s418 + $0x68] sm:$0xff] %vm1759, %v1746
      %1774 = vst.msk [vmem:[%s418 + $0x70] sm:$0xff] %vm1759, %v1751
      %1775 = vst.msk [vmem:[%s418 + $0x78] sm:$0xff] %vm1759, %v1756
      %s1776 = smul.u32 8, %s22
      %p1777 = scmp.lt.s32.totalorder %s21, 1
      %s1778 = scalar_select %p1777, %s21, 1
      %p1779 = scmp.lt.s32.totalorder %s1776, 15
      %s1780 = scalar_select %p1779, %s1776, 15
      %s1781 = smul.addr %s1780, 2
      %s1782 = smul.addr %s1778, 32
      %s1783 = sadd.s32 %s1781, %s1782
      %s1784 = smul.addr %s1783, 8
      %s1785 = scalar_lea.vmem %s6, %s1784
      // Predicated region
      $region45: #{tpu_custom_call.1} parent=43 // pred_check
        %p1786 = pneg %p212
      $region46: #{tpu_custom_call.1} parent=43 // pred_check_branch
        %1788 = sbr.rel (%p1786) target = $region48
      $region47: #{tpu_custom_call.1} parent=43 // pred_region
        %s1789 = smul.u32 8, %s22
      $region48: #{tpu_custom_call.1} parent=43 // pred_fallthru
        _
    $region44: #{tpu_custom_call.1} parent=5 // pred_fallthru
      _
    %p1790 = scmp.le.s32.totalorder 2, %s12
    // Predicated region
    $region49: #{tpu_custom_call.1} parent=5 // pred_check
      %p1791 = pneg %p1790
    $region50: #{tpu_custom_call.1} parent=5 // pred_check_branch
      %1793 = sbr.rel (%p1791) target = $region52
    $region51: #{tpu_custom_call.1} parent=5 // pred_region
      %s1794 = ssub.s32 %s12, 2
      // Predicated region
      $region53: #{tpu_custom_call.1} parent=51 // pred_check
        %p1795 = pneg %p218
      $region54: #{tpu_custom_call.1} parent=51 // pred_check_branch
        %1797 = sbr.rel (%p1795) target = $region56
      $region55: #{tpu_custom_call.1} parent=51 // pred_region
        %s1798 = smul.u32 8, %s24
        %p1799 = scmp.lt.s32.totalorder %s23, 1
        %s1800 = scalar_select %p1799, %s23, 1
        %p1801 = scmp.lt.s32.totalorder %s1798, 15
        %s1802 = scalar_select %p1801, %s1798, 15
        %s1803 = smul.addr %s1802, 2
        %s1804 = smul.addr %s1800, 32
        %s1805 = sadd.s32 %s1803, %s1804
        %s1806 = smul.addr %s1805, 8
        %s1807 = scalar_lea.vmem %s6, %s1806
      $region56: #{tpu_custom_call.1} parent=51 // pred_fallthru
        _
    $region52: #{tpu_custom_call.1} parent=5 // pred_fallthru
      _
  $region6: #{tpu_custom_call.1} parent=0 // loop_footer
    %s16 = sadd.s32 1, %s12
  $region7: #{tpu_custom_call.1} parent=0 // loop_footer_branch
    %11 = sbr.rel target = $region3
  $region8: #{tpu_custom_call.1} parent=0 // loop_exit
    _

</llo_original>
